<compile_context>
chip_gen: v5e
topology: v5e:2x2
jax: 0.10.0
libtpu: 0.0.40
codegen_flags: <defaults>
</compile_context>

<pallas_src>
import math

import jax
import jax.numpy as jnp
import numpy as np
from jax.experimental import pallas as pl

# ----------------------------- model / problem sizes -----------------------------
T = 8        # target (decoder) sequence length
S = 10       # source (encoder) sequence length
B = 2        # batch
E = 32       # args.decoder_embed_dim
H = 4        # args.decoder_attention_heads
D = E // H   # head dim
FFN = 64     # args.decoder_ffn_embed_dim
EPS = 1e-5
NEG = -1e30  # additive mask value (stands in for -inf)
SCALE = D ** -0.5

# ------------------------- packed-parameter blob layout ---------------------------
# Weight blob (rows, native PyTorch (out, in) layout, all slices sublane-aligned):
#   [0      : 3E     ) self-attn  Wq*scale | Wk | Wv   (in_proj layout)
#   [3E     : 4E     ) self-attn  Wo
#   [4E     : 5E     ) enc-attn   Wq*scale
#   [5E     : 7E     ) enc-attn   Wk | Wv
#   [7E     : 8E     ) enc-attn   Wo
#   [8E     : 8E+FFN ) fc1        W1                    -> (8E+FFN, E)
# fc2 weight W2 is a separate (E, FFN) buffer.
# Vector blob: all biases + layernorm params as one (VEC_LEN, 1) column.
_OFF = {}


def _build_offsets():
    off = 0

    def add(name, n):
        nonlocal off
        _OFF[name] = (off, off + n)
        off += n

    add("sa_bqkv", 3 * E)
    add("sa_bo", E)
    add("sa_g", E)
    add("sa_b", E)
    add("ea_bq", E)
    add("ea_bkv", 2 * E)
    add("ea_bo", E)
    add("ea_g", E)
    add("ea_b", E)
    add("f_b1", FFN)
    add("f_b2", E)
    add("f_g", E)
    add("f_b", E)
    return off


VEC_LEN = _build_offsets()


# ----------------------------------- kernel --------------------------------------
def _make_kernel(need_attn):
    def kernel(xT_ref, encT_ref, smask_ref, emask_ref, w_ref, w2_ref, v_ref, *out_refs):
        """Fully fused TransformerDecoderLayer forward (whole batch, one step).

        xT_ref:   (E, B*T)        decoder input, feature-major, columns = b*T + t
        encT_ref: (E, B*S)        encoder output, feature-major, columns = b*S + s
        smask_ref:(B*T, B*T)      additive causal mask, block-diagonal over batch
        emask_ref:(B*T, B*S)      additive key-padding mask, block-diagonal over batch
        w_ref:    (8E+FFN, E)     packed weights (PyTorch (out, in) layout)
        w2_ref:   (E, FFN)        fc2 weight
        v_ref:    (VEC_LEN, 1)    packed biases / layernorm params (columns)
        out_refs[0]: (E, B*T)     final layer output (feature-major)
        out_refs[1]: (B*T, B*S)   encoder-attention weights, head-averaged (if need_attn)
        """
        xT = xT_ref[...]
        encT = encT_ref[...]

        def seg(name):
            a, b = _OFF[name]
            return v_ref[a:b]                      # (n, 1) column, static slice

        def layer_norm(yT, g, b):
            # features on rows (axis 0)
            mu = jnp.mean(yT, axis=0, keepdims=True)
            d = yT - mu
            var = jnp.mean(d * d, axis=0, keepdims=True)
            return d * jax.lax.rsqrt(var + EPS) * g + b

        def heads(m2d):                            # (E, N) -> (H, D, N), free re-tiling
            return m2d.reshape(H, D, m2d.shape[-1])

        def attention(qT_all, kT_all, vT_all, mask):
            # qT_all: (E, Nq), kT_all/vT_all: (E, Nk), mask: (Nq, Nk)
            q = jnp.swapaxes(heads(qT_all), 1, 2)  # (H, Nq, D)  (XLU swap)
            kT = heads(kT_all)                     # (H, D, Nk)  K already pre-transposed
            vT = heads(vT_all)                     # (H, D, Nk)
            s = jnp.einsum("hqd,hdk->hqk", q, kT,
                           preferred_element_type=jnp.float32) + mask[None]
            s = s - jnp.max(s, axis=-1, keepdims=True)
            e = jnp.exp(s)
            p = e * pl.reciprocal(jnp.sum(e, axis=-1, keepdims=True), approx=True)
            pT = jnp.swapaxes(p, 1, 2)             # (H, Nk, Nq)
            ctxT = jnp.einsum("hdk,hkq->hdq", vT, pT,
                              preferred_element_type=jnp.float32)
            return ctxT.reshape(E, q.shape[1]), p  # (E, Nq), (H, Nq, Nk)

        # ---- self-attention sublayer (post-norm) ----
        qkvT = jnp.dot(w_ref[0:3 * E], xT,
                       preferred_element_type=jnp.float32) + seg("sa_bqkv")
        ctxT, _ = attention(qkvT[0:E], qkvT[E:2 * E], qkvT[2 * E:3 * E], smask_ref[...])
        saT = jnp.dot(w_ref[3 * E:4 * E], ctxT,
                      preferred_element_type=jnp.float32) + seg("sa_bo")
        x1T = layer_norm(xT + saT, seg("sa_g"), seg("sa_b"))

        # ---- encoder attention sublayer ----
        qT = jnp.dot(w_ref[4 * E:5 * E], x1T,
                     preferred_element_type=jnp.float32) + seg("ea_bq")
        kvT = jnp.dot(w_ref[5 * E:7 * E], encT,
                      preferred_element_type=jnp.float32) + seg("ea_bkv")
        ctxT, p_enc = attention(qT, kvT[0:E], kvT[E:2 * E], emask_ref[...])
        eaT = jnp.dot(w_ref[7 * E:8 * E], ctxT,
                      preferred_element_type=jnp.float32) + seg("ea_bo")
        x2T = layer_norm(x1T + eaT, seg("ea_g"), seg("ea_b"))

        # ---- feed-forward sublayer ----
        hT = jnp.maximum(
            jnp.dot(w_ref[8 * E:8 * E + FFN], x2T,
                    preferred_element_type=jnp.float32) + seg("f_b1"), 0.0)
        yT = jnp.dot(w2_ref[...], hT,
                     preferred_element_type=jnp.float32) + seg("f_b2")
        out_refs[0][...] = layer_norm(x2T + yT, seg("f_g"), seg("f_b"))

        if need_attn:
            out_refs[1][...] = jnp.mean(p_enc, axis=0)   # (B*T, B*S)

    return kernel


# ---------------------------------- wrapper ---------------------------------------
def transformer_decoder_layer(kparams, x, encoder_out, encoder_padding_mask,
                              self_attn_mask, need_attn=True):
    """Forward pass of TransformerDecoderLayer (eval mode, post-norm).

    x: (T, B, E); encoder_out: (S, B, E); encoder_padding_mask: (B, S) bool (True = pad);
    self_attn_mask: (T, T) additive float32 causal mask.
    Returns (x_out (T, B, E), attn (B, T, S) or None).
    """
    Tq, Bq, Ecur = x.shape
    Sk = encoder_out.shape[0]
    nq = Bq * Tq
    ns = Bq * Sk

    # Feature-major activation slabs (columns ordered b-major: col = b*T + t).
    xT = jnp.transpose(jnp.transpose(x, (1, 0, 2)).reshape(nq, Ecur), (1, 0))      # (E, B*T)
    encT = jnp.transpose(jnp.transpose(encoder_out, (1, 0, 2)).reshape(ns, Ecur),
                         (1, 0))                                                    # (E, B*S)

    # Block-diagonal (over batch) additive masks.
    qb = jnp.repeat(jnp.arange(Bq), Tq)                                 # (B*T,)
    kb_self = qb
    kb_enc = jnp.repeat(jnp.arange(Bq), Sk)                             # (B*S,)
    smask_big = jnp.where(qb[:, None] == kb_self[None, :],
                          jnp.tile(self_attn_mask, (Bq, Bq)), NEG).astype(jnp.float32)
    kp_flat = jnp.where(encoder_padding_mask, NEG, 0.0).astype(jnp.float32).reshape(-1)
    emask_big = jnp.where(qb[:, None] == kb_enc[None, :],
                          kp_flat[None, :], NEG).astype(jnp.float32)

    if need_attn:
        out_shape = (jax.ShapeDtypeStruct((Ecur, nq), jnp.float32),
                     jax.ShapeDtypeStruct((nq, ns), jnp.float32))
    else:
        out_shape = (jax.ShapeDtypeStruct((Ecur, nq), jnp.float32),)

    outs = pl.pallas_call(
        _make_kernel(need_attn),
        out_shape=out_shape,
    )(xT, encT, smask_big, emask_big,
      kparams["w_main"], kparams["w2"], kparams["vec"])

    outT = outs[0]                                                       # (E, B*T)
    x_out = jnp.transpose(jnp.transpose(outT, (1, 0)).reshape(Bq, Tq, Ecur), (1, 0, 2))

    if need_attn:
        pm = outs[1]                                                     # (B*T, B*S)
        attn = jnp.stack([pm[b * Tq:(b + 1) * Tq, b * Sk:(b + 1) * Sk]
                          for b in range(Bq)], axis=0)                   # (B, T, S)
        return x_out, attn
    return x_out, None


# ------------------------------ parameter init -------------------------------------
def init_params(key):
    """Canonical (PyTorch-layout) parameters, used by the pure-JAX reference."""
    def xavier(k, out_f, in_f):
        bound = math.sqrt(6.0 / (in_f + out_f))
        return jax.random.uniform(k, (out_f, in_f), jnp.float32, -bound, bound)

    def attn_params(k):
        ks = jax.random.split(k, 4)
        return dict(
            wq=xavier(ks[0], E, E), bq=jnp.zeros((1, E), jnp.float32),
            wk=xavier(ks[1], E, E), bk=jnp.zeros((1, E), jnp.float32),
            wv=xavier(ks[2], E, E), bv=jnp.zeros((1, E), jnp.float32),
            wo=xavier(ks[3], E, E), bo=jnp.zeros((1, E), jnp.float32),
        )

    def ln_params():
        return dict(g=jnp.ones((1, E), jnp.float32), b=jnp.zeros((1, E), jnp.float32))

    ks = jax.random.split(key, 4)
    return dict(
        self_attn=attn_params(ks[0]),
        encoder_attn=attn_params(ks[1]),
        self_attn_ln=ln_params(),
        encoder_attn_ln=ln_params(),
        ffn=dict(
            w1=xavier(ks[2], FFN, E), b1=jnp.zeros((1, FFN), jnp.float32),
            w2=xavier(ks[3], E, FFN), b2=jnp.zeros((1, E), jnp.float32),
            g=jnp.ones((1, E), jnp.float32),    # final_layer_norm weight
            be=jnp.zeros((1, E), jnp.float32),  # final_layer_norm bias
        ),
    )


def prepare_kernel_params(params):
    """Host-side prep: fold SCALE into Wq/bq, pack into 3 DMA blobs (native layout)."""
    sa, ea, f = params["self_attn"], params["encoder_attn"], params["ffn"]
    ln1, ln2 = params["self_attn_ln"], params["encoder_attn_ln"]

    w_main = jnp.concatenate([
        sa["wq"] * SCALE, sa["wk"], sa["wv"], sa["wo"],
        ea["wq"] * SCALE, ea["wk"], ea["wv"], ea["wo"],
        f["w1"],
    ], axis=0)                                          # (8E + FFN, E)

    def col(v):
        return v.reshape(-1, 1)

    vec = jnp.concatenate([
        col(sa["bq"] * SCALE), col(sa["bk"]), col(sa["bv"]), col(sa["bo"]),
        col(ln1["g"]), col(ln1["b"]),
        col(ea["bq"] * SCALE), col(ea["bk"]), col(ea["bv"]), col(ea["bo"]),
        col(ln2["g"]), col(ln2["b"]),
        col(f["b1"]), col(f["b2"]), col(f["g"]), col(f["be"]),
    ], axis=0)                                          # (VEC_LEN, 1)
    assert vec.shape == (VEC_LEN, 1)

    return dict(w_main=w_main, w2=f["w2"], vec=vec)


# ------------------------------- pure-JAX reference --------------------------------
def _ref_mha(x_q, x_kv, mask, p):
    hp = jax.lax.Precision.HIGHEST
    q = (jnp.einsum("bte,oe->bto", x_q, p["wq"], precision=hp) + p["bq"]) * SCALE
    k = jnp.einsum("bse,oe->bso", x_kv, p["wk"], precision=hp) + p["bk"]
    v = jnp.einsum("bse,oe->bso", x_kv, p["wv"], precision=hp) + p["bv"]
    Bq, Tq, _ = q.shape
    Sk = k.shape[1]
    qh = q.reshape(Bq, Tq, H, D)
    kh = k.reshape(Bq, Sk, H, D)
    vh = v.reshape(Bq, Sk, H, D)
    s = jnp.einsum("bthd,bshd->bhts", qh, kh, precision=hp) + mask[:, None]
    pw = jax.nn.softmax(s, axis=-1)
    ctx = jnp.einsum("bhts,bshd->bthd", pw, vh, precision=hp).reshape(Bq, Tq, E)
    out = jnp.einsum("bte,oe->bto", ctx, p["wo"], precision=hp) + p["bo"]
    return out, pw.mean(axis=1)


def reference_forward(params, x, encoder_out, encoder_padding_mask, self_attn_mask):
    hp = jax.lax.Precision.HIGHEST

    def ln(y, g, b):
        mu = y.mean(-1, keepdims=True)
        var = ((y - mu) ** 2).mean(-1, keepdims=True)
        return (y - mu) / jnp.sqrt(var + EPS) * g + b

    Tq, Bq, _ = x.shape
    Sk = encoder_out.shape[0]

    residual = x
    xq = jnp.transpose(x, (1, 0, 2))
    mask = jnp.broadcast_to(self_attn_mask[None], (Bq, Tq, Tq))
    sa, _ = _ref_mha(xq, xq, mask, params["self_attn"])
    x = ln(residual + jnp.transpose(sa, (1, 0, 2)),
           params["self_attn_ln"]["g"], params["self_attn_ln"]["b"])

    residual = x
    xq = jnp.transpose(x, (1, 0, 2))
    kv = jnp.transpose(encoder_out, (1, 0, 2))
    emask = jnp.broadcast_to(
        jnp.where(encoder_padding_mask[:, None, :], NEG, 0.0).astype(jnp.float32),
        (Bq, Tq, Sk))
    ea, attn = _ref_mha(xq, kv, emask, params["encoder_attn"])
    x = ln(residual + jnp.transpose(ea, (1, 0, 2)),
           params["encoder_attn_ln"]["g"], params["encoder_attn_ln"]["b"])

    residual = x
    h = jax.nn.relu(jnp.einsum("tbe,fe->tbf", x, params["ffn"]["w1"], precision=hp)
                    + params["ffn"]["b1"])
    y = jnp.einsum("tbf,ef->tbe", h, params["ffn"]["w2"], precision=hp) + params["ffn"]["b2"]
    x = ln(residual + y, params["ffn"]["g"], params["ffn"]["be"])
    return x, attn


# ------------------------------------- main -----------------------------------------
if __name__ == "__main__":
    key = jax.random.PRNGKey(0)
    kx, ke, kp = jax.random.split(key, 3)

    x = jax.random.normal(kx, (T, B, E), jnp.float32)
    encoder_out = jax.random.normal(ke, (S, B, E), jnp.float32)
    # padding mask: last 3 source positions of batch element 1 are pads (True = pad)
    encoder_padding_mask = jnp.zeros((B, S), jnp.bool_).at[1, S - 3:].set(True)
    # causal future mask (additive), as produced by fairseq buffered_future_mask
    self_attn_mask = jnp.where(
        jnp.triu(jnp.ones((T, T), jnp.bool_), k=1), NEG, 0.0).astype(jnp.float32)

    params = init_params(kp)
    kparams = prepare_kernel_params(params)

    layer_fn = jax.jit(transformer_decoder_layer, static_argnames=("need_attn",))

    out, attn = layer_fn(kparams, x, encoder_out, encoder_padding_mask, self_attn_mask)
    out = jax.block_until_ready(out)
    attn = jax.block_until_ready(attn)

    ref_out, ref_attn = reference_forward(
        params, x, encoder_out, encoder_padding_mask, self_attn_mask)
    np.testing.assert_allclose(np.asarray(out), np.asarray(ref_out), rtol=2e-2, atol=2e-2)
    np.testing.assert_allclose(np.asarray(attn), np.asarray(ref_attn), rtol=2e-2, atol=2e-2)

    # need_attn=False path (attention-weight output and its reduce/DMA elided)
    out_na, attn_na = layer_fn(kparams, x, encoder_out, encoder_padding_mask,
                               self_attn_mask, need_attn=False)
    out_na = jax.block_until_ready(out_na)
    assert attn_na is None
    np.testing.assert_allclose(np.asarray(out_na), np.asarray(ref_out), rtol=2e-2, atol=2e-2)

    print("KERNEL_OK")
</pallas_src>

<mosaic_0001>
module attributes {stable_mosaic.version = 11 : i64} {
  func.func @kernel(%arg0: memref<32x16xf32, #tpu.memory_space<vmem>>, %arg1: memref<32x20xf32, #tpu.memory_space<vmem>>, %arg2: memref<16x16xf32, #tpu.memory_space<vmem>>, %arg3: memref<16x20xf32, #tpu.memory_space<vmem>>, %arg4: memref<320x32xf32, #tpu.memory_space<vmem>>, %arg5: memref<32x64xf32, #tpu.memory_space<vmem>>, %arg6: memref<544x1xf32, #tpu.memory_space<vmem>>, %arg7: memref<32x16xf32, #tpu.memory_space<vmem>>, %arg8: memref<16x20xf32, #tpu.memory_space<vmem>>) attributes {dimension_semantics = [], scalar_prefetch = 0 : i64, scratch_operands = 0 : i64, tpu.core_type = #tpu.core_type<tc>} {
    %c0 = arith.constant 0 : index
    %c0_0 = arith.constant 0 : index
    %0 = vector.load %arg0[%c0, %c0_0] : memref<32x16xf32, #tpu.memory_space<vmem>>, vector<32x16xf32>
    %c0_1 = arith.constant 0 : index
    %c0_2 = arith.constant 0 : index
    %1 = vector.load %arg1[%c0_1, %c0_2] : memref<32x20xf32, #tpu.memory_space<vmem>>, vector<32x20xf32>
    %c0_3 = arith.constant 0 : index
    %c0_4 = arith.constant 0 : index
    %2 = vector.load %arg4[%c0_3, %c0_4] : memref<320x32xf32, #tpu.memory_space<vmem>>, vector<96x32xf32>
    %cst = arith.constant dense<0.000000e+00> : vector<96x16xf32>
    %3 = tpu.matmul %2, %0, %cst {dimension_numbers = #tpu.dot_dimension_numbers<[1], [0], [0], [1], [0, 0, 1, 1], [], []>} : vector<96x32xf32>, vector<32x16xf32>, vector<96x16xf32> -> vector<96x16xf32>
    %c0_5 = arith.constant 0 : index
    %c0_6 = arith.constant 0 : index
    %4 = vector.load %arg6[%c0_5, %c0_6] : memref<544x1xf32, #tpu.memory_space<vmem>>, vector<96x1xf32>
    %5 = vector.broadcast %4 : vector<96x1xf32> to vector<96x16xf32>
    %6 = arith.addf %3, %5 : vector<96x16xf32>
    %7 = vector.extract_strided_slice %6 {offsets = [0, 0], sizes = [32, 16], strides = [1, 1]} : vector<96x16xf32> to vector<32x16xf32>
    %8 = vector.extract_strided_slice %6 {offsets = [32, 0], sizes = [32, 16], strides = [1, 1]} : vector<96x16xf32> to vector<32x16xf32>
    %9 = vector.extract_strided_slice %6 {offsets = [64, 0], sizes = [32, 16], strides = [1, 1]} : vector<96x16xf32> to vector<32x16xf32>
    %c0_7 = arith.constant 0 : index
    %c0_8 = arith.constant 0 : index
    %10 = vector.load %arg2[%c0_7, %c0_8] : memref<16x16xf32, #tpu.memory_space<vmem>>, vector<16x16xf32>
    %11 = vector.shape_cast %7 : vector<32x16xf32> to vector<4x8x16xf32>
    %12 = tpu.transpose %11, [0, 2, 1] : vector<4x8x16xf32> -> vector<4x16x8xf32>
    %13 = vector.shape_cast %8 : vector<32x16xf32> to vector<4x8x16xf32>
    %14 = vector.shape_cast %9 : vector<32x16xf32> to vector<4x8x16xf32>
    "tpu.trace_start"() <{level = 10 : i32, message = "hqd,hdk->hqk"}> : () -> ()
    %cst_9 = arith.constant dense<0.000000e+00> : vector<4x16x16xf32>
    %15 = tpu.matmul %12, %13, %cst_9 {dimension_numbers = #tpu.dot_dimension_numbers<[2], [1], [1], [2], [0, 0, 0, 1, 1, 2], [0], [0]>} : vector<4x16x8xf32>, vector<4x8x16xf32>, vector<4x16x16xf32> -> vector<4x16x16xf32>
    "tpu.trace_stop"() : () -> ()
    %16 = vector.shape_cast %10 : vector<16x16xf32> to vector<1x16x16xf32>
    %17 = vector.broadcast %16 : vector<1x16x16xf32> to vector<4x16x16xf32>
    %18 = arith.addf %15, %17 : vector<4x16x16xf32>
    %cst_10 = arith.constant dense<0xFF800000> : vector<4x16xf32>
    %19 = vector.multi_reduction <maximumf>, %18, %cst_10 [2] : vector<4x16x16xf32> to vector<4x16xf32>
    %20 = vector.shape_cast %19 : vector<4x16xf32> to vector<4x16x1xf32>
    %21 = vector.broadcast %20 : vector<4x16x1xf32> to vector<4x16x16xf32>
    %22 = arith.subf %18, %21 : vector<4x16x16xf32>
    %23 = math.exp %22 : vector<4x16x16xf32>
    %cst_11 = arith.constant dense<0.000000e+00> : vector<4x16xf32>
    %24 = vector.multi_reduction <add>, %23, %cst_11 [2] : vector<4x16x16xf32> to vector<4x16xf32>
    %25 = vector.shape_cast %24 : vector<4x16xf32> to vector<4x16x1xf32>
    %26 = tpu.reciprocal %25 {approx = true} : vector<4x16x1xf32> -> vector<4x16x1xf32>
    %27 = vector.broadcast %26 : vector<4x16x1xf32> to vector<4x16x16xf32>
    %28 = arith.mulf %23, %27 : vector<4x16x16xf32>
    %29 = tpu.transpose %28, [0, 2, 1] : vector<4x16x16xf32> -> vector<4x16x16xf32>
    "tpu.trace_start"() <{level = 10 : i32, message = "hdk,hkq->hdq"}> : () -> ()
    %cst_12 = arith.constant dense<0.000000e+00> : vector<4x8x16xf32>
    %30 = tpu.matmul %14, %29, %cst_12 {dimension_numbers = #tpu.dot_dimension_numbers<[2], [1], [1], [2], [0, 0, 0, 1, 1, 2], [0], [0]>} : vector<4x8x16xf32>, vector<4x16x16xf32>, vector<4x8x16xf32> -> vector<4x8x16xf32>
    "tpu.trace_stop"() : () -> ()
    %31 = vector.shape_cast %30 : vector<4x8x16xf32> to vector<32x16xf32>
    %c96 = arith.constant 96 : index
    %c0_13 = arith.constant 0 : index
    %32 = vector.load %arg4[%c96, %c0_13] : memref<320x32xf32, #tpu.memory_space<vmem>>, vector<32x32xf32>
    %cst_14 = arith.constant dense<0.000000e+00> : vector<32x16xf32>
    %33 = tpu.matmul %32, %31, %cst_14 {dimension_numbers = #tpu.dot_dimension_numbers<[1], [0], [0], [1], [0, 0, 1, 1], [], []>} : vector<32x32xf32>, vector<32x16xf32>, vector<32x16xf32> -> vector<32x16xf32>
    %c96_15 = arith.constant 96 : index
    %c0_16 = arith.constant 0 : index
    %34 = vector.load %arg6[%c96_15, %c0_16] : memref<544x1xf32, #tpu.memory_space<vmem>>, vector<32x1xf32>
    %35 = vector.broadcast %34 : vector<32x1xf32> to vector<32x16xf32>
    %36 = arith.addf %33, %35 : vector<32x16xf32>
    %37 = arith.addf %0, %36 : vector<32x16xf32>
    %c128 = arith.constant 128 : index
    %c0_17 = arith.constant 0 : index
    %38 = vector.load %arg6[%c128, %c0_17] : memref<544x1xf32, #tpu.memory_space<vmem>>, vector<32x1xf32>
    %c160 = arith.constant 160 : index
    %c0_18 = arith.constant 0 : index
    %39 = vector.load %arg6[%c160, %c0_18] : memref<544x1xf32, #tpu.memory_space<vmem>>, vector<32x1xf32>
    %cst_19 = arith.constant dense<0.000000e+00> : vector<16xf32>
    %40 = vector.multi_reduction <add>, %37, %cst_19 [0] : vector<32x16xf32> to vector<16xf32>
    %41 = vector.shape_cast %40 : vector<16xf32> to vector<1x16xf32>
    %cst_20 = arith.constant 3.200000e+01 : f32
    %42 = vector.broadcast %cst_20 : f32 to vector<1x16xf32>
    %43 = arith.divf %41, %42 : vector<1x16xf32>
    %44 = vector.broadcast %43 : vector<1x16xf32> to vector<32x16xf32>
    %45 = arith.subf %37, %44 : vector<32x16xf32>
    %46 = arith.mulf %45, %45 : vector<32x16xf32>
    %cst_21 = arith.constant dense<0.000000e+00> : vector<16xf32>
    %47 = vector.multi_reduction <add>, %46, %cst_21 [0] : vector<32x16xf32> to vector<16xf32>
    %48 = vector.shape_cast %47 : vector<16xf32> to vector<1x16xf32>
    %cst_22 = arith.constant 3.200000e+01 : f32
    %49 = vector.broadcast %cst_22 : f32 to vector<1x16xf32>
    %50 = arith.divf %48, %49 : vector<1x16xf32>
    %cst_23 = arith.constant 9.99999974E-6 : f32
    %51 = vector.broadcast %cst_23 : f32 to vector<1x16xf32>
    %52 = arith.addf %50, %51 : vector<1x16xf32>
    %53 = math.rsqrt %52 : vector<1x16xf32>
    %54 = vector.broadcast %53 : vector<1x16xf32> to vector<32x16xf32>
    %55 = arith.mulf %45, %54 : vector<32x16xf32>
    %56 = vector.broadcast %38 : vector<32x1xf32> to vector<32x16xf32>
    %57 = arith.mulf %55, %56 : vector<32x16xf32>
    %58 = vector.broadcast %39 : vector<32x1xf32> to vector<32x16xf32>
    %59 = arith.addf %57, %58 : vector<32x16xf32>
    %c128_24 = arith.constant 128 : index
    %c0_25 = arith.constant 0 : index
    %60 = vector.load %arg4[%c128_24, %c0_25] : memref<320x32xf32, #tpu.memory_space<vmem>>, vector<32x32xf32>
    %cst_26 = arith.constant dense<0.000000e+00> : vector<32x16xf32>
    %61 = tpu.matmul %60, %59, %cst_26 {dimension_numbers = #tpu.dot_dimension_numbers<[1], [0], [0], [1], [0, 0, 1, 1], [], []>} : vector<32x32xf32>, vector<32x16xf32>, vector<32x16xf32> -> vector<32x16xf32>
    %c192 = arith.constant 192 : index
    %c0_27 = arith.constant 0 : index
    %62 = vector.load %arg6[%c192, %c0_27] : memref<544x1xf32, #tpu.memory_space<vmem>>, vector<32x1xf32>
    %63 = vector.broadcast %62 : vector<32x1xf32> to vector<32x16xf32>
    %64 = arith.addf %61, %63 : vector<32x16xf32>
    %c160_28 = arith.constant 160 : index
    %c0_29 = arith.constant 0 : index
    %65 = vector.load %arg4[%c160_28, %c0_29] : memref<320x32xf32, #tpu.memory_space<vmem>>, vector<64x32xf32>
    %cst_30 = arith.constant dense<0.000000e+00> : vector<64x20xf32>
    %66 = tpu.matmul %65, %1, %cst_30 {dimension_numbers = #tpu.dot_dimension_numbers<[1], [0], [0], [1], [0, 0, 1, 1], [], []>} : vector<64x32xf32>, vector<32x20xf32>, vector<64x20xf32> -> vector<64x20xf32>
    %c224 = arith.constant 224 : index
    %c0_31 = arith.constant 0 : index
    %67 = vector.load %arg6[%c224, %c0_31] : memref<544x1xf32, #tpu.memory_space<vmem>>, vector<64x1xf32>
    %68 = vector.broadcast %67 : vector<64x1xf32> to vector<64x20xf32>
    %69 = arith.addf %66, %68 : vector<64x20xf32>
    %70 = vector.extract_strided_slice %69 {offsets = [0, 0], sizes = [32, 20], strides = [1, 1]} : vector<64x20xf32> to vector<32x20xf32>
    %71 = vector.extract_strided_slice %69 {offsets = [32, 0], sizes = [32, 20], strides = [1, 1]} : vector<64x20xf32> to vector<32x20xf32>
    %c0_32 = arith.constant 0 : index
    %c0_33 = arith.constant 0 : index
    %72 = vector.load %arg3[%c0_32, %c0_33] : memref<16x20xf32, #tpu.memory_space<vmem>>, vector<16x20xf32>
    %73 = vector.shape_cast %64 : vector<32x16xf32> to vector<4x8x16xf32>
    %74 = tpu.transpose %73, [0, 2, 1] : vector<4x8x16xf32> -> vector<4x16x8xf32>
    %75 = vector.shape_cast %70 : vector<32x20xf32> to vector<4x8x20xf32>
    %76 = vector.shape_cast %71 : vector<32x20xf32> to vector<4x8x20xf32>
    "tpu.trace_start"() <{level = 10 : i32, message = "hqd,hdk->hqk"}> : () -> ()
    %cst_34 = arith.constant dense<0.000000e+00> : vector<4x16x20xf32>
    %77 = tpu.matmul %74, %75, %cst_34 {dimension_numbers = #tpu.dot_dimension_numbers<[2], [1], [1], [2], [0, 0, 0, 1, 1, 2], [0], [0]>} : vector<4x16x8xf32>, vector<4x8x20xf32>, vector<4x16x20xf32> -> vector<4x16x20xf32>
    "tpu.trace_stop"() : () -> ()
    %78 = vector.shape_cast %72 : vector<16x20xf32> to vector<1x16x20xf32>
    %79 = vector.broadcast %78 : vector<1x16x20xf32> to vector<4x16x20xf32>
    %80 = arith.addf %77, %79 : vector<4x16x20xf32>
    %cst_35 = arith.constant dense<0xFF800000> : vector<4x16xf32>
    %81 = vector.multi_reduction <maximumf>, %80, %cst_35 [2] : vector<4x16x20xf32> to vector<4x16xf32>
    %82 = vector.shape_cast %81 : vector<4x16xf32> to vector<4x16x1xf32>
    %83 = vector.broadcast %82 : vector<4x16x1xf32> to vector<4x16x20xf32>
    %84 = arith.subf %80, %83 : vector<4x16x20xf32>
    %85 = math.exp %84 : vector<4x16x20xf32>
    %cst_36 = arith.constant dense<0.000000e+00> : vector<4x16xf32>
    %86 = vector.multi_reduction <add>, %85, %cst_36 [2] : vector<4x16x20xf32> to vector<4x16xf32>
    %87 = vector.shape_cast %86 : vector<4x16xf32> to vector<4x16x1xf32>
    %88 = tpu.reciprocal %87 {approx = true} : vector<4x16x1xf32> -> vector<4x16x1xf32>
    %89 = vector.broadcast %88 : vector<4x16x1xf32> to vector<4x16x20xf32>
    %90 = arith.mulf %85, %89 : vector<4x16x20xf32>
    %91 = tpu.transpose %90, [0, 2, 1] : vector<4x16x20xf32> -> vector<4x20x16xf32>
    "tpu.trace_start"() <{level = 10 : i32, message = "hdk,hkq->hdq"}> : () -> ()
    %cst_37 = arith.constant dense<0.000000e+00> : vector<4x8x16xf32>
    %92 = tpu.matmul %76, %91, %cst_37 {dimension_numbers = #tpu.dot_dimension_numbers<[2], [1], [1], [2], [0, 0, 0, 1, 1, 2], [0], [0]>} : vector<4x8x20xf32>, vector<4x20x16xf32>, vector<4x8x16xf32> -> vector<4x8x16xf32>
    "tpu.trace_stop"() : () -> ()
    %93 = vector.shape_cast %92 : vector<4x8x16xf32> to vector<32x16xf32>
    %c224_38 = arith.constant 224 : index
    %c0_39 = arith.constant 0 : index
    %94 = vector.load %arg4[%c224_38, %c0_39] : memref<320x32xf32, #tpu.memory_space<vmem>>, vector<32x32xf32>
    %cst_40 = arith.constant dense<0.000000e+00> : vector<32x16xf32>
    %95 = tpu.matmul %94, %93, %cst_40 {dimension_numbers = #tpu.dot_dimension_numbers<[1], [0], [0], [1], [0, 0, 1, 1], [], []>} : vector<32x32xf32>, vector<32x16xf32>, vector<32x16xf32> -> vector<32x16xf32>
    %c288 = arith.constant 288 : index
    %c0_41 = arith.constant 0 : index
    %96 = vector.load %arg6[%c288, %c0_41] : memref<544x1xf32, #tpu.memory_space<vmem>>, vector<32x1xf32>
    %97 = vector.broadcast %96 : vector<32x1xf32> to vector<32x16xf32>
    %98 = arith.addf %95, %97 : vector<32x16xf32>
    %99 = arith.addf %59, %98 : vector<32x16xf32>
    %c320 = arith.constant 320 : index
    %c0_42 = arith.constant 0 : index
    %100 = vector.load %arg6[%c320, %c0_42] : memref<544x1xf32, #tpu.memory_space<vmem>>, vector<32x1xf32>
    %c352 = arith.constant 352 : index
    %c0_43 = arith.constant 0 : index
    %101 = vector.load %arg6[%c352, %c0_43] : memref<544x1xf32, #tpu.memory_space<vmem>>, vector<32x1xf32>
    %cst_44 = arith.constant dense<0.000000e+00> : vector<16xf32>
    %102 = vector.multi_reduction <add>, %99, %cst_44 [0] : vector<32x16xf32> to vector<16xf32>
    %103 = vector.shape_cast %102 : vector<16xf32> to vector<1x16xf32>
    %cst_45 = arith.constant 3.200000e+01 : f32
    %104 = vector.broadcast %cst_45 : f32 to vector<1x16xf32>
    %105 = arith.divf %103, %104 : vector<1x16xf32>
    %106 = vector.broadcast %105 : vector<1x16xf32> to vector<32x16xf32>
    %107 = arith.subf %99, %106 : vector<32x16xf32>
    %108 = arith.mulf %107, %107 : vector<32x16xf32>
    %cst_46 = arith.constant dense<0.000000e+00> : vector<16xf32>
    %109 = vector.multi_reduction <add>, %108, %cst_46 [0] : vector<32x16xf32> to vector<16xf32>
    %110 = vector.shape_cast %109 : vector<16xf32> to vector<1x16xf32>
    %cst_47 = arith.constant 3.200000e+01 : f32
    %111 = vector.broadcast %cst_47 : f32 to vector<1x16xf32>
    %112 = arith.divf %110, %111 : vector<1x16xf32>
    %cst_48 = arith.constant 9.99999974E-6 : f32
    %113 = vector.broadcast %cst_48 : f32 to vector<1x16xf32>
    %114 = arith.addf %112, %113 : vector<1x16xf32>
    %115 = math.rsqrt %114 : vector<1x16xf32>
    %116 = vector.broadcast %115 : vector<1x16xf32> to vector<32x16xf32>
    %117 = arith.mulf %107, %116 : vector<32x16xf32>
    %118 = vector.broadcast %100 : vector<32x1xf32> to vector<32x16xf32>
    %119 = arith.mulf %117, %118 : vector<32x16xf32>
    %120 = vector.broadcast %101 : vector<32x1xf32> to vector<32x16xf32>
    %121 = arith.addf %119, %120 : vector<32x16xf32>
    %c256 = arith.constant 256 : index
    %c0_49 = arith.constant 0 : index
    %122 = vector.load %arg4[%c256, %c0_49] : memref<320x32xf32, #tpu.memory_space<vmem>>, vector<64x32xf32>
    %cst_50 = arith.constant dense<0.000000e+00> : vector<64x16xf32>
    %123 = tpu.matmul %122, %121, %cst_50 {dimension_numbers = #tpu.dot_dimension_numbers<[1], [0], [0], [1], [0, 0, 1, 1], [], []>} : vector<64x32xf32>, vector<32x16xf32>, vector<64x16xf32> -> vector<64x16xf32>
    %c384 = arith.constant 384 : index
    %c0_51 = arith.constant 0 : index
    %124 = vector.load %arg6[%c384, %c0_51] : memref<544x1xf32, #tpu.memory_space<vmem>>, vector<64x1xf32>
    %125 = vector.broadcast %124 : vector<64x1xf32> to vector<64x16xf32>
    %126 = arith.addf %123, %125 : vector<64x16xf32>
    %cst_52 = arith.constant 0.000000e+00 : f32
    %127 = vector.broadcast %cst_52 : f32 to vector<64x16xf32>
    %128 = arith.maximumf %126, %127 : vector<64x16xf32>
    %c0_53 = arith.constant 0 : index
    %c0_54 = arith.constant 0 : index
    %129 = vector.load %arg5[%c0_53, %c0_54] : memref<32x64xf32, #tpu.memory_space<vmem>>, vector<32x64xf32>
    %cst_55 = arith.constant dense<0.000000e+00> : vector<32x16xf32>
    %130 = tpu.matmul %129, %128, %cst_55 {dimension_numbers = #tpu.dot_dimension_numbers<[1], [0], [0], [1], [0, 0, 1, 1], [], []>} : vector<32x64xf32>, vector<64x16xf32>, vector<32x16xf32> -> vector<32x16xf32>
    %c448 = arith.constant 448 : index
    %c0_56 = arith.constant 0 : index
    %131 = vector.load %arg6[%c448, %c0_56] : memref<544x1xf32, #tpu.memory_space<vmem>>, vector<32x1xf32>
    %132 = vector.broadcast %131 : vector<32x1xf32> to vector<32x16xf32>
    %133 = arith.addf %130, %132 : vector<32x16xf32>
    %134 = arith.addf %121, %133 : vector<32x16xf32>
    %c480 = arith.constant 480 : index
    %c0_57 = arith.constant 0 : index
    %135 = vector.load %arg6[%c480, %c0_57] : memref<544x1xf32, #tpu.memory_space<vmem>>, vector<32x1xf32>
    %c512 = arith.constant 512 : index
    %c0_58 = arith.constant 0 : index
    %136 = vector.load %arg6[%c512, %c0_58] : memref<544x1xf32, #tpu.memory_space<vmem>>, vector<32x1xf32>
    %cst_59 = arith.constant dense<0.000000e+00> : vector<16xf32>
    %137 = vector.multi_reduction <add>, %134, %cst_59 [0] : vector<32x16xf32> to vector<16xf32>
    %138 = vector.shape_cast %137 : vector<16xf32> to vector<1x16xf32>
    %cst_60 = arith.constant 3.200000e+01 : f32
    %139 = vector.broadcast %cst_60 : f32 to vector<1x16xf32>
    %140 = arith.divf %138, %139 : vector<1x16xf32>
    %141 = vector.broadcast %140 : vector<1x16xf32> to vector<32x16xf32>
    %142 = arith.subf %134, %141 : vector<32x16xf32>
    %143 = arith.mulf %142, %142 : vector<32x16xf32>
    %cst_61 = arith.constant dense<0.000000e+00> : vector<16xf32>
    %144 = vector.multi_reduction <add>, %143, %cst_61 [0] : vector<32x16xf32> to vector<16xf32>
    %145 = vector.shape_cast %144 : vector<16xf32> to vector<1x16xf32>
    %cst_62 = arith.constant 3.200000e+01 : f32
    %146 = vector.broadcast %cst_62 : f32 to vector<1x16xf32>
    %147 = arith.divf %145, %146 : vector<1x16xf32>
    %cst_63 = arith.constant 9.99999974E-6 : f32
    %148 = vector.broadcast %cst_63 : f32 to vector<1x16xf32>
    %149 = arith.addf %147, %148 : vector<1x16xf32>
    %150 = math.rsqrt %149 : vector<1x16xf32>
    %151 = vector.broadcast %150 : vector<1x16xf32> to vector<32x16xf32>
    %152 = arith.mulf %142, %151 : vector<32x16xf32>
    %153 = vector.broadcast %135 : vector<32x1xf32> to vector<32x16xf32>
    %154 = arith.mulf %152, %153 : vector<32x16xf32>
    %155 = vector.broadcast %136 : vector<32x1xf32> to vector<32x16xf32>
    %156 = arith.addf %154, %155 : vector<32x16xf32>
    %c0_64 = arith.constant 0 : index
    %c0_65 = arith.constant 0 : index
    %157 = vector.load %arg7[%c0_64, %c0_65] : memref<32x16xf32, #tpu.memory_space<vmem>>, vector<32x16xf32>
    tpu.vector_store %arg7[%c0_64, %c0_65], %156 {strides = array<i32>} : memref<32x16xf32, #tpu.memory_space<vmem>>, vector<32x16xf32>,
    %cst_66 = arith.constant dense<0.000000e+00> : vector<16x20xf32>
    %158 = vector.multi_reduction <add>, %90, %cst_66 [0] : vector<4x16x20xf32> to vector<16x20xf32>
    %cst_67 = arith.constant 4.000000e+00 : f32
    %159 = vector.broadcast %cst_67 : f32 to vector<16x20xf32>
    %160 = arith.divf %158, %159 : vector<16x20xf32>
    %c0_68 = arith.constant 0 : index
    %c0_69 = arith.constant 0 : index
    %161 = vector.load %arg8[%c0_68, %c0_69] : memref<16x20xf32, #tpu.memory_space<vmem>>, vector<16x20xf32>
    tpu.vector_store %arg8[%c0_68, %c0_69], %160 {strides = array<i32>} : memref<16x20xf32, #tpu.memory_space<vmem>>, vector<16x20xf32>,
    return
  }
}

</mosaic_0001>

<llo_original>
// kernel: eq.25
$region0: #{eq.25}
  %s0 = inlined_call_operand.vmem [shape: s32[2,10], index: 0, kind: input, shape index: {}]
  %s1 = inlined_call_operand.vmem [shape: s32[20], index: 1, kind: output, shape index: {}]
  $region1: #{eq.25} parent=0
    #allocation0 [shape = 'u8[4096]{0}', space=vmem, size = 0x1000, scoped, tag = 'scoped mem for output reshape']
    #allocation1 [shape = 'u8[4096]{0}', space=vmem, size = 0x1000, scoped, tag = 'scoped mem for input reshape']
    %s3 = ssub.s32 4, 1
    %v4 = vld [vmem:[%s0] sm:%s3]
    %5 = vst [vmem:[#allocation1] sm:%s3] %v4
    %v6 = vld [vmem:[#allocation1] sm:$0x1]
    %vm7 = vcmask 80896
    %8 = vst.msk [vmem:[#allocation0] sm:$0x1] %vm7, %v6
    %s9 = scalar_lea.vmem [#allocation1], 1
    %v10 = vld [vmem:[%s9] sm:$0x1]
    %11 = vrot.lane.b32.xlu0 %v10, 10
    %v12 = vpop.permute.xlu0 %11
    %vm13 = vcmask 162896
    %14 = vst.msk [vmem:[#allocation0] sm:$0x1] %vm13, %v12
    %s16 = ssub.s32 2, 1
    %v17 = vld [vmem:[#allocation0] sm:%s16]
    %s19 = ssub.s32 2, 1
    %20 = vst [vmem:[%s1] sm:%s19] %v17

// kernel: eq.15
$region0: #{eq.15}
  %s0 = inlined_call_operand.vmem [shape: s32[2,8], index: 0, kind: input, shape index: {}]
  %s1 = inlined_call_operand.vmem [shape: s32[16], index: 1, kind: output, shape index: {}]
  $region1: #{eq.15} parent=0
    #allocation0 [shape = 'u8[4096]{0}', space=vmem, size = 0x1000, scoped, tag = 'scoped mem for output reshape']
    #allocation1 [shape = 'u8[4096]{0}', space=vmem, size = 0x1000, scoped, tag = 'scoped mem for input reshape']
    %s3 = ssub.s32 4, 1
    %v4 = vld [vmem:[%s0] sm:%s3]
    %5 = vst [vmem:[#allocation1] sm:%s3] %v4
    %v6 = vld [vmem:[#allocation1] sm:$0x1]
    %vm7 = vcmask 64512
    %8 = vst.msk [vmem:[#allocation0] sm:$0x1] %vm7, %v6
    %s9 = scalar_lea.vmem [#allocation1], 1
    %v10 = vld [vmem:[%s9] sm:$0x1]
    %11 = vrot.lane.b32.xlu0 %v10, 8
    %v12 = vpop.permute.xlu0 %11
    %vm13 = vcmask 130112
    %14 = vst.msk [vmem:[#allocation0] sm:$0x1] %vm13, %v12
    %s16 = ssub.s32 2, 1
    %v17 = vld [vmem:[#allocation0] sm:%s16]
    %s19 = ssub.s32 2, 1
    %20 = vst [vmem:[%s1] sm:%s19] %v17

// kernel: tile.8
$region0: #{tile.8}
  #allocation0 [shape = 's32[1]{0}', space=sflag, size = 0x4, scoped, tag = 'scoped memory for tile.8']
  %s0 = inlined_call_operand.vmem [shape: f32[8,8], index: 0, kind: input, shape index: {}]
  %s1 = inlined_call_operand.vmem [shape: f32[2,8,2,8], index: 1, kind: output, shape index: {}]
  // Predicated region
  $region2: #{tile.8} parent=0 // pred_check
    _
  $region3: #{tile.8} parent=0 // pred_check_branch
    %3 = sbr.rel (0) target = $region5
  $region4: #{tile.8} parent=0 // pred_region
    _
  $region5: #{tile.8} parent=0 // pred_fallthru
    _
  %v4 = vld [vmem:[%s0] ss:$0 sm:$0xff]
  %5 = vst [vmem:[%s1] sm:$0x3] %v4
  %s6 = scalar_lea.vmem %s1, 16
  %7 = vst [vmem:[%s6] sm:$0x3] %v4
  %s8 = scalar_lea.vmem %s0, 1
  %v9 = vld [vmem:[%s8] ss:$0 sm:$0xff]
  %s10 = scalar_lea.vmem %s1, 2
  %11 = vst [vmem:[%s10] sm:$0x3] %v9
  %s12 = scalar_lea.vmem %s1, 18
  %13 = vst [vmem:[%s12] sm:$0x3] %v9
  %s14 = scalar_lea.vmem %s0, 2
  %v15 = vld [vmem:[%s14] ss:$0 sm:$0xff]
  %s16 = scalar_lea.vmem %s1, 4
  %17 = vst [vmem:[%s16] sm:$0x3] %v15
  %s18 = scalar_lea.vmem %s1, 20
  %19 = vst [vmem:[%s18] sm:$0x3] %v15
  %s20 = scalar_lea.vmem %s0, 3
  %v21 = vld [vmem:[%s20] ss:$0 sm:$0xff]
  %s22 = scalar_lea.vmem %s1, 6
  %23 = vst [vmem:[%s22] sm:$0x3] %v21
  %s24 = scalar_lea.vmem %s1, 22
  %25 = vst [vmem:[%s24] sm:$0x3] %v21
  %s26 = scalar_lea.vmem %s0, 4
  %v27 = vld [vmem:[%s26] ss:$0 sm:$0xff]
  %s28 = scalar_lea.vmem %s1, 8
  %29 = vst [vmem:[%s28] sm:$0x3] %v27
  %s30 = scalar_lea.vmem %s1, 24
  %31 = vst [vmem:[%s30] sm:$0x3] %v27
  %s32 = scalar_lea.vmem %s0, 5
  %v33 = vld [vmem:[%s32] ss:$0 sm:$0xff]
  %s34 = scalar_lea.vmem %s1, 10
  %35 = vst [vmem:[%s34] sm:$0x3] %v33
  %s36 = scalar_lea.vmem %s1, 26
  %37 = vst [vmem:[%s36] sm:$0x3] %v33
  %s38 = scalar_lea.vmem %s0, 6
  %v39 = vld [vmem:[%s38] ss:$0 sm:$0xff]
  %s40 = scalar_lea.vmem %s1, 12
  %41 = vst [vmem:[%s40] sm:$0x3] %v39
  %s42 = scalar_lea.vmem %s1, 28
  %43 = vst [vmem:[%s42] sm:$0x3] %v39
  %s44 = scalar_lea.vmem %s0, 7
  %v45 = vld [vmem:[%s44] ss:$0 sm:$0xff]
  %s46 = scalar_lea.vmem %s1, 14
  %47 = vst [vmem:[%s46] sm:$0x3] %v45
  %s48 = scalar_lea.vmem %s1, 30
  %49 = vst [vmem:[%s48] sm:$0x3] %v45

// kernel: tile.9
$region0: #{tile.9}
  %s0 = inlined_call_operand.vmem [shape: f32[2,8,2,8], index: 0, kind: input, shape index: {}]
  %s1 = inlined_call_operand.vmem [shape: f32[16,16], index: 1, kind: output, shape index: {}]
  $region1: #{tile.9} parent=0
    #allocation0 [shape = 'u8[65536]{0}', space=vmem, size = 0x10000, scoped, tag = 'scoped mem for input reshape']
    %s3 = ssub.s32 4, 1
    %s4 = scalar_lea.vmem %s0, 30
    %v5 = vld [vmem:[%s4] sm:%s3]
    %s6 = scalar_lea.vmem [#allocation0], 120
    %7 = vst [vmem:[%s6] sm:%s3] %v5
    %s8 = scalar_lea.vmem %s0, 28
    %v9 = vld [vmem:[%s8] sm:%s3]
    %s10 = scalar_lea.vmem [#allocation0], 112
    %11 = vst [vmem:[%s10] sm:%s3] %v9
    %s12 = scalar_lea.vmem %s0, 26
    %v13 = vld [vmem:[%s12] sm:%s3]
    %s14 = scalar_lea.vmem [#allocation0], 104
    %15 = vst [vmem:[%s14] sm:%s3] %v13
    %s16 = scalar_lea.vmem %s0, 24
    %v17 = vld [vmem:[%s16] sm:%s3]
    %s18 = scalar_lea.vmem [#allocation0], 96
    %19 = vst [vmem:[%s18] sm:%s3] %v17
    %s20 = scalar_lea.vmem %s0, 22
    %v21 = vld [vmem:[%s20] sm:%s3]
    %s22 = scalar_lea.vmem [#allocation0], 88
    %23 = vst [vmem:[%s22] sm:%s3] %v21
    %s24 = scalar_lea.vmem %s0, 20
    %v25 = vld [vmem:[%s24] sm:%s3]
    %s26 = scalar_lea.vmem [#allocation0], 80
    %27 = vst [vmem:[%s26] sm:%s3] %v25
    %s28 = scalar_lea.vmem %s0, 18
    %v29 = vld [vmem:[%s28] sm:%s3]
    %s30 = scalar_lea.vmem [#allocation0], 72
    %31 = vst [vmem:[%s30] sm:%s3] %v29
    %s32 = scalar_lea.vmem %s0, 16
    %v33 = vld [vmem:[%s32] sm:%s3]
    %s34 = scalar_lea.vmem [#allocation0], 64
    %35 = vst [vmem:[%s34] sm:%s3] %v33
    %s36 = scalar_lea.vmem %s0, 14
    %v37 = vld [vmem:[%s36] sm:%s3]
    %s38 = scalar_lea.vmem [#allocation0], 56
    %39 = vst [vmem:[%s38] sm:%s3] %v37
    %s40 = scalar_lea.vmem %s0, 12
    %v41 = vld [vmem:[%s40] sm:%s3]
    %s42 = scalar_lea.vmem [#allocation0], 48
    %43 = vst [vmem:[%s42] sm:%s3] %v41
    %s44 = scalar_lea.vmem %s0, 10
    %v45 = vld [vmem:[%s44] sm:%s3]
    %s46 = scalar_lea.vmem [#allocation0], 40
    %47 = vst [vmem:[%s46] sm:%s3] %v45
    %s48 = scalar_lea.vmem %s0, 8
    %v49 = vld [vmem:[%s48] sm:%s3]
    %s50 = scalar_lea.vmem [#allocation0], 32
    %51 = vst [vmem:[%s50] sm:%s3] %v49
    %s52 = scalar_lea.vmem %s0, 6
    %v53 = vld [vmem:[%s52] sm:%s3]
    %s54 = scalar_lea.vmem [#allocation0], 24
    %55 = vst [vmem:[%s54] sm:%s3] %v53
    %s56 = scalar_lea.vmem %s0, 4
    %v57 = vld [vmem:[%s56] sm:%s3]
    %s58 = scalar_lea.vmem [#allocation0], 16
    %59 = vst [vmem:[%s58] sm:%s3] %v57
    %s60 = scalar_lea.vmem %s0, 2
    %v61 = vld [vmem:[%s60] sm:%s3]
    %s62 = scalar_lea.vmem [#allocation0], 8
    %63 = vst [vmem:[%s62] sm:%s3] %v61
    %v64 = vld [vmem:[%s0] sm:%s3]
    %65 = vst [vmem:[#allocation0] sm:%s3] %v64
    %v66 = vld [vmem:[#allocation0] ss:$8 sm:$0xf]
    %v67 = vld [vmem:[#allocation0] ss:$8 sm:$0xf0]
    %vm68 = vcmask 1047556
    %v69 = vsel %vm68, %v67, %v66
    %vm70 = vcmask 64512
    %71 = vst.msk [vmem:[%s1] sm:$0xff] %vm70, %v69
    %s72 = scalar_lea.vmem [#allocation0], 64
    %v73 = vld [vmem:[%s72] ss:$8 sm:$0xf]
    %s74 = scalar_lea.vmem [#allocation0], 64
    %v75 = vld [vmem:[%s74] ss:$8 sm:$0xf0]
    %vm76 = vcmask 1047556
    %v77 = vsel %vm76, %v75, %v73
    %vm78 = vcmask 64512
    %s79 = scalar_lea.vmem %s1, 8
    %80 = vst.msk [vmem:[%s79] sm:$0xff] %vm78, %v77
    %s81 = scalar_lea.vmem [#allocation0], 1
    %v82 = vld [vmem:[%s81] ss:$8 sm:$0xf]
    %s83 = scalar_lea.vmem [#allocation0], 1
    %v84 = vld [vmem:[%s83] ss:$8 sm:$0xf0]
    %vm85 = vcmask 1047556
    %v86 = vsel %vm85, %v84, %v82
    %87 = vrot.lane.b32.xlu0 %v86, 8
    %v88 = vpop.permute.xlu0 %87
    %vm89 = vcmask 130112
    %90 = vst.msk [vmem:[%s1] sm:$0xff] %vm89, %v88
    %s91 = scalar_lea.vmem [#allocation0], 65
    %v92 = vld [vmem:[%s91] ss:$8 sm:$0xf]
    %s93 = scalar_lea.vmem [#allocation0], 65
    %v94 = vld [vmem:[%s93] ss:$8 sm:$0xf0]
    %vm95 = vcmask 1047556
    %v96 = vsel %vm95, %v94, %v92
    %97 = vrot.lane.b32.xlu0 %v96, 8
    %v98 = vpop.permute.xlu0 %97
    %vm99 = vcmask 130112
    %s100 = scalar_lea.vmem %s1, 8
    %101 = vst.msk [vmem:[%s100] sm:$0xff] %vm99, %v98

// kernel: transformer_decoder_layer.1
$region0: #{transformer_decoder_layer.1}
  #allocation0 [shape = 'u32[]', space=smem, size = 0x4, offset = 0x4, fixed_abs, tag = 'smem constant byte address 0x4 - core index']
  #allocation1 [shape = 'u32[72,128]{1,0:T(1,128)}', space=vmem, size = 0x9000, scoped, tag = 'internal scratch']
  %s0 = inlined_call_operand.vmem [shape: f32[32,16], index: 0, kind: input, shape index: {}]
  %s1 = inlined_call_operand.vmem [shape: f32[32,20], index: 1, kind: input, shape index: {}]
  %s2 = inlined_call_operand.vmem [shape: f32[16,16], index: 2, kind: input, shape index: {}]
  %s3 = inlined_call_operand.vmem [shape: f32[16,20], index: 3, kind: input, shape index: {}]
  %s4 = inlined_call_operand.vmem [shape: f32[320,32], index: 4, kind: input, shape index: {}]
  %s5 = inlined_call_operand.vmem [shape: f32[32,64], index: 5, kind: input, shape index: {}]
  %s6 = inlined_call_operand.vmem [shape: f32[544,1], index: 6, kind: input, shape index: {}]
  %s7 = inlined_call_operand.vmem [shape: f32[32,16], index: 7, kind: output, shape index: {0}]
  %s8 = inlined_call_operand.vmem [shape: f32[16,20], index: 8, kind: output, shape index: {1}]
  %9 = xla_tuple %s7, %s8
  %s10 = sld [smem:[#allocation0]]
  $region46: #{transformer_decoder_layer.1} parent=0
    _
  %s12 = ssub.s32 1, %s10
  %s13 = scalar_select 0, %s12, %s10
  // Predicated region
  $region2: #{transformer_decoder_layer.1} parent=0 // pred_check
    _
  $region3: #{transformer_decoder_layer.1} parent=0 // pred_check_branch
    %15 = sbr.rel (0) target = $region5
  $region4: #{transformer_decoder_layer.1} parent=0 // pred_region
    _
  $region5: #{transformer_decoder_layer.1} parent=0 // pred_fallthru
    _
  // Predicated region
  $region6: #{transformer_decoder_layer.1} parent=0 // pred_check
    _
  $region7: #{transformer_decoder_layer.1} parent=0 // pred_check_branch
    %17 = sbr.rel (0) target = $region9
  $region8: #{transformer_decoder_layer.1} parent=0 // pred_region
    _
  $region9: #{transformer_decoder_layer.1} parent=0 // pred_fallthru
    _
  // Predicated region
  $region10: #{transformer_decoder_layer.1} parent=0 // pred_check
    _
  $region11: #{transformer_decoder_layer.1} parent=0 // pred_check_branch
    %19 = sbr.rel (0) target = $region13
  $region12: #{transformer_decoder_layer.1} parent=0 // pred_region
    _
  $region13: #{transformer_decoder_layer.1} parent=0 // pred_fallthru
    _
  // Predicated region
  $region14: #{transformer_decoder_layer.1} parent=0 // pred_check
    _
  $region15: #{transformer_decoder_layer.1} parent=0 // pred_check_branch
    %21 = sbr.rel (0) target = $region17
  $region16: #{transformer_decoder_layer.1} parent=0 // pred_region
    _
  $region17: #{transformer_decoder_layer.1} parent=0 // pred_fallthru
    _
  // Predicated region
  $region18: #{transformer_decoder_layer.1} parent=0 // pred_check
    _
  $region19: #{transformer_decoder_layer.1} parent=0 // pred_check_branch
    %23 = sbr.rel (0) target = $region21
  $region20: #{transformer_decoder_layer.1} parent=0 // pred_region
    _
  $region21: #{transformer_decoder_layer.1} parent=0 // pred_fallthru
    _
  // Predicated region
  $region22: #{transformer_decoder_layer.1} parent=0 // pred_check
    _
  $region23: #{transformer_decoder_layer.1} parent=0 // pred_check_branch
    %25 = sbr.rel (0) target = $region25
  $region24: #{transformer_decoder_layer.1} parent=0 // pred_region
    _
  $region25: #{transformer_decoder_layer.1} parent=0 // pred_fallthru
    _
  // Predicated region
  $region26: #{transformer_decoder_layer.1} parent=0 // pred_check
    _
  $region27: #{transformer_decoder_layer.1} parent=0 // pred_check_branch
    %27 = sbr.rel (0) target = $region29
  $region28: #{transformer_decoder_layer.1} parent=0 // pred_region
    _
  $region29: #{transformer_decoder_layer.1} parent=0 // pred_fallthru
    _
  %v28 = vld [vmem:[%s0] sm:$0xff]
  %v29 = vld [vmem:[%s0 + $0x8] sm:$0xff]
  %v30 = vld [vmem:[%s0 + $0x10] sm:$0xff]
  %v31 = vld [vmem:[%s0 + $0x18] sm:$0xff]
  %v32 = vld [vmem:[%s1] sm:$0xff]
  %v33 = vld [vmem:[%s1 + $0x8] sm:$0xff]
  %v34 = vld [vmem:[%s1 + $0x10] sm:$0xff]
  %v35 = vld [vmem:[%s1 + $0x18] sm:$0xff]
  %v36 = vld [vmem:[%s4] sm:$0xff]
  %v37 = vld [vmem:[%s4 + $0x8] sm:$0xff]
  %v38 = vld [vmem:[%s4 + $0x10] sm:$0xff]
  %v39 = vld [vmem:[%s4 + $0x18] sm:$0xff]
  %v40 = vld [vmem:[%s4 + $0x20] sm:$0xff]
  %v41 = vld [vmem:[%s4 + $0x28] sm:$0xff]
  %v42 = vld [vmem:[%s4 + $0x30] sm:$0xff]
  %v43 = vld [vmem:[%s4 + $0x38] sm:$0xff]
  %v44 = vld [vmem:[%s4 + $0x40] sm:$0xff]
  %v45 = vld [vmem:[%s4 + $0x48] sm:$0xff]
  %v46 = vld [vmem:[%s4 + $0x50] sm:$0xff]
  %v47 = vld [vmem:[%s4 + $0x58] sm:$0xff]
  %v48 = vld [vmem:[%s6] sm:$0xff]
  %v49 = vld [vmem:[%s6 + $0x8] sm:$0xff]
  %v50 = vld [vmem:[%s6 + $0x10] sm:$0xff]
  %v51 = vld [vmem:[%s6 + $0x18] sm:$0xff]
  %v52 = vld [vmem:[%s6 + $0x20] sm:$0xff]
  %v53 = vld [vmem:[%s6 + $0x28] sm:$0xff]
  %v54 = vld [vmem:[%s6 + $0x30] sm:$0xff]
  %v55 = vld [vmem:[%s6 + $0x38] sm:$0xff]
  %v56 = vld [vmem:[%s6 + $0x40] sm:$0xff]
  %v57 = vld [vmem:[%s6 + $0x48] sm:$0xff]
  %v58 = vld [vmem:[%s6 + $0x50] sm:$0xff]
  %v59 = vld [vmem:[%s6 + $0x58] sm:$0xff]
  %61 = vset.pattern.permute.xlu0 0
  %62 = vperm.xlu0 %61, %v48
  %v63 = vpop.permute.xlu0 %62
  %66 = vset.pattern.permute.xlu0 0
  %67 = vperm.xlu0 %66, %v49
  %v68 = vpop.permute.xlu0 %67
  %71 = vset.pattern.permute.xlu0 0
  %72 = vperm.xlu0 %71, %v50
  %v73 = vpop.permute.xlu0 %72
  %76 = vset.pattern.permute.xlu0 0
  %77 = vperm.xlu0 %76, %v51
  %v78 = vpop.permute.xlu0 %77
  %81 = vset.pattern.permute.xlu0 0
  %82 = vperm.xlu0 %81, %v52
  %v83 = vpop.permute.xlu0 %82
  %86 = vset.pattern.permute.xlu0 0
  %87 = vperm.xlu0 %86, %v53
  %v88 = vpop.permute.xlu0 %87
  %91 = vset.pattern.permute.xlu0 0
  %92 = vperm.xlu0 %91, %v54
  %v93 = vpop.permute.xlu0 %92
  %96 = vset.pattern.permute.xlu0 0
  %97 = vperm.xlu0 %96, %v55
  %v98 = vpop.permute.xlu0 %97
  %101 = vset.pattern.permute.xlu0 0
  %102 = vperm.xlu0 %101, %v56
  %v103 = vpop.permute.xlu0 %102
  %106 = vset.pattern.permute.xlu0 0
  %107 = vperm.xlu0 %106, %v57
  %v108 = vpop.permute.xlu0 %107
  %111 = vset.pattern.permute.xlu0 0
  %112 = vperm.xlu0 %111, %v58
  %v113 = vpop.permute.xlu0 %112
  %116 = vset.pattern.permute.xlu0 0
  %117 = vperm.xlu0 %116, %v59
  %v118 = vpop.permute.xlu0 %117
  %vm120 = vcmask 261120
  %v122 = vsel %vm120, %v36, 0
  %v125 = vsel %vm120, %v37, 0
  %v128 = vsel %vm120, %v38, 0
  %v131 = vsel %vm120, %v39, 0
  %v134 = vsel %vm120, %v40, 0
  %v137 = vsel %vm120, %v41, 0
  %v140 = vsel %vm120, %v42, 0
  %v143 = vsel %vm120, %v43, 0
  %v146 = vsel %vm120, %v44, 0
  %v149 = vsel %vm120, %v45, 0
  %v152 = vsel %vm120, %v46, 0
  %v155 = vsel %vm120, %v47, 0
  %157 = vmatpush.msra.mxu0 0.0
  %158 = vmatpush.msra.mxu0 0.0
  %159 = vmatpush.msra.mxu0 0.0
  %160 = vmatpush.msra.mxu0 0.0
  %161 = vmatpush.msra.mxu0 0.0
  %162 = vmatpush.msra.mxu0 0.0
  %163 = vmatpush.msra.mxu0 0.0
  %164 = vmatpush.msra.mxu0 0.0
  %165 = vmatpush.msra.mxu0 0.0
  %166 = vmatpush.msra.mxu0 0.0
  %167 = vmatpush.msra.mxu0 0.0
  %168 = vmatpush.msra.mxu0 0.0
  %169 = vmatpush.msra.mxu0 %v31
  %170 = vmatpush.msra.mxu0 %v30
  %171 = vmatpush.msra.mxu0 %v29
  %172 = vmatpush.msra.mxu0 %v28
  %173 = vmatmul.f32.gmra.mxu0 %v122
  %v174 = vpop.f32.mrf.mxu0
  %v175 = vadd.f32 %v63, %v174
  %176 = vmatmul.f32.gmra.mxu0 %v125
  %v177 = vpop.f32.mrf.mxu0
  %v178 = vadd.f32 %v68, %v177
  %179 = vmatmul.f32.gmra.mxu0 %v128
  %v180 = vpop.f32.mrf.mxu0
  %v181 = vadd.f32 %v73, %v180
  %182 = vmatmul.f32.gmra.mxu0 %v131
  %v183 = vpop.f32.mrf.mxu0
  %v184 = vadd.f32 %v78, %v183
  %185 = vmatmul.f32.gmra.mxu0 %v134
  %v186 = vpop.f32.mrf.mxu0
  %v187 = vadd.f32 %v83, %v186
  %188 = vmatmul.f32.gmra.mxu0 %v137
  %v189 = vpop.f32.mrf.mxu0
  %v190 = vadd.f32 %v88, %v189
  %191 = vmatmul.f32.gmra.mxu0 %v140
  %v192 = vpop.f32.mrf.mxu0
  %v193 = vadd.f32 %v93, %v192
  %194 = vmatmul.f32.gmra.mxu0 %v143
  %v195 = vpop.f32.mrf.mxu0
  %v196 = vadd.f32 %v98, %v195
  %197 = vmatmul.f32.gmra.mxu0 %v146
  %v198 = vpop.f32.mrf.mxu0
  %v199 = vadd.f32 %v103, %v198
  %200 = vmatmul.f32.gmra.mxu0 %v149
  %v201 = vpop.f32.mrf.mxu0
  %v202 = vadd.f32 %v108, %v201
  %203 = vmatmul.f32.gmra.mxu0 %v152
  %v204 = vpop.f32.mrf.mxu0
  %v205 = vadd.f32 %v113, %v204
  %206 = vmatmul.f32.gmra.mxu0 %v155
  %v207 = vpop.f32.mrf.mxu0
  %v208 = vadd.f32 %v118, %v207
  %209 = vdwg.mxu0
  %v210 = vld [vmem:[%s2] sm:$0xff]
  %v211 = vld [vmem:[%s2 + $0x8] sm:$0xff]
  %212 = vxpose.xlu0.b32.start [1/16] %v175, 128
  %213 = vxpose.xlu0.b32.cont [2/16] 0.0, 128
  %214 = vxpose.xlu0.b32.cont [3/16] 0.0, 128
  %215 = vxpose.xlu0.b32.cont [4/16] 0.0, 128
  %216 = vxpose.xlu0.b32.cont [5/16] 0.0, 128
  %217 = vxpose.xlu0.b32.cont [6/16] 0.0, 128
  %218 = vxpose.xlu0.b32.cont [7/16] 0.0, 128
  %219 = vxpose.xlu0.b32.cont [8/16] 0.0, 128
  %220 = vxpose.xlu0.b32.cont [9/16] 0.0, 128
  %221 = vxpose.xlu0.b32.cont [10/16] 0.0, 128
  %222 = vxpose.xlu0.b32.cont [11/16] 0.0, 128
  %223 = vxpose.xlu0.b32.cont [12/16] 0.0, 128
  %224 = vxpose.xlu0.b32.cont [13/16] 0.0, 128
  %225 = vxpose.xlu0.b32.cont [14/16] 0.0, 128
  %226 = vxpose.xlu0.b32.cont [15/16] 0.0, 128
  %227 = vxpose.xlu0.b32.end [16/16] 0.0, 128
  %v228 = vpop.trf.xlu0
  %v229 = vpop.trf.xlu0
  %v230 = vpop.trf.xlu0
  %v231 = vpop.trf.xlu0
  %v232 = vpop.trf.xlu0
  %v233 = vpop.trf.xlu0
  %v234 = vpop.trf.xlu0
  %v235 = vpop.trf.xlu0
  %v236 = vpop.trf.xlu0
  %v237 = vpop.trf.xlu0
  %v238 = vpop.trf.xlu0
  %v239 = vpop.trf.xlu0
  %v240 = vpop.trf.xlu0
  %v241 = vpop.trf.xlu0
  %v242 = vpop.trf.xlu0
  %v243 = vpop.trf.xlu0
  %244 = vxpose.xlu0.b32.start [1/16] %v178, 128
  %245 = vxpose.xlu0.b32.cont [2/16] 0.0, 128
  %246 = vxpose.xlu0.b32.cont [3/16] 0.0, 128
  %247 = vxpose.xlu0.b32.cont [4/16] 0.0, 128
  %248 = vxpose.xlu0.b32.cont [5/16] 0.0, 128
  %249 = vxpose.xlu0.b32.cont [6/16] 0.0, 128
  %250 = vxpose.xlu0.b32.cont [7/16] 0.0, 128
  %251 = vxpose.xlu0.b32.cont [8/16] 0.0, 128
  %252 = vxpose.xlu0.b32.cont [9/16] 0.0, 128
  %253 = vxpose.xlu0.b32.cont [10/16] 0.0, 128
  %254 = vxpose.xlu0.b32.cont [11/16] 0.0, 128
  %255 = vxpose.xlu0.b32.cont [12/16] 0.0, 128
  %256 = vxpose.xlu0.b32.cont [13/16] 0.0, 128
  %257 = vxpose.xlu0.b32.cont [14/16] 0.0, 128
  %258 = vxpose.xlu0.b32.cont [15/16] 0.0, 128
  %259 = vxpose.xlu0.b32.end [16/16] 0.0, 128
  %v260 = vpop.trf.xlu0
  %v261 = vpop.trf.xlu0
  %v262 = vpop.trf.xlu0
  %v263 = vpop.trf.xlu0
  %v264 = vpop.trf.xlu0
  %v265 = vpop.trf.xlu0
  %v266 = vpop.trf.xlu0
  %v267 = vpop.trf.xlu0
  %v268 = vpop.trf.xlu0
  %v269 = vpop.trf.xlu0
  %v270 = vpop.trf.xlu0
  %v271 = vpop.trf.xlu0
  %v272 = vpop.trf.xlu0
  %v273 = vpop.trf.xlu0
  %v274 = vpop.trf.xlu0
  %v275 = vpop.trf.xlu0
  %276 = vxpose.xlu0.b32.start [1/16] %v181, 128
  %277 = vxpose.xlu0.b32.cont [2/16] 0.0, 128
  %278 = vxpose.xlu0.b32.cont [3/16] 0.0, 128
  %279 = vxpose.xlu0.b32.cont [4/16] 0.0, 128
  %280 = vxpose.xlu0.b32.cont [5/16] 0.0, 128
  %281 = vxpose.xlu0.b32.cont [6/16] 0.0, 128
  %282 = vxpose.xlu0.b32.cont [7/16] 0.0, 128
  %283 = vxpose.xlu0.b32.cont [8/16] 0.0, 128
  %284 = vxpose.xlu0.b32.cont [9/16] 0.0, 128
  %285 = vxpose.xlu0.b32.cont [10/16] 0.0, 128
  %286 = vxpose.xlu0.b32.cont [11/16] 0.0, 128
  %287 = vxpose.xlu0.b32.cont [12/16] 0.0, 128
  %288 = vxpose.xlu0.b32.cont [13/16] 0.0, 128
  %289 = vxpose.xlu0.b32.cont [14/16] 0.0, 128
  %290 = vxpose.xlu0.b32.cont [15/16] 0.0, 128
  %291 = vxpose.xlu0.b32.end [16/16] 0.0, 128
  %v292 = vpop.trf.xlu0
  %v293 = vpop.trf.xlu0
  %v294 = vpop.trf.xlu0
  %v295 = vpop.trf.xlu0
  %v296 = vpop.trf.xlu0
  %v297 = vpop.trf.xlu0
  %v298 = vpop.trf.xlu0
  %v299 = vpop.trf.xlu0
  %v300 = vpop.trf.xlu0
  %v301 = vpop.trf.xlu0
  %v302 = vpop.trf.xlu0
  %v303 = vpop.trf.xlu0
  %v304 = vpop.trf.xlu0
  %v305 = vpop.trf.xlu0
  %v306 = vpop.trf.xlu0
  %v307 = vpop.trf.xlu0
  %308 = vxpose.xlu0.b32.start [1/16] %v184, 128
  %309 = vxpose.xlu0.b32.cont [2/16] 0.0, 128
  %310 = vxpose.xlu0.b32.cont [3/16] 0.0, 128
  %311 = vxpose.xlu0.b32.cont [4/16] 0.0, 128
  %312 = vxpose.xlu0.b32.cont [5/16] 0.0, 128
  %313 = vxpose.xlu0.b32.cont [6/16] 0.0, 128
  %314 = vxpose.xlu0.b32.cont [7/16] 0.0, 128
  %315 = vxpose.xlu0.b32.cont [8/16] 0.0, 128
  %316 = vxpose.xlu0.b32.cont [9/16] 0.0, 128
  %317 = vxpose.xlu0.b32.cont [10/16] 0.0, 128
  %318 = vxpose.xlu0.b32.cont [11/16] 0.0, 128
  %319 = vxpose.xlu0.b32.cont [12/16] 0.0, 128
  %320 = vxpose.xlu0.b32.cont [13/16] 0.0, 128
  %321 = vxpose.xlu0.b32.cont [14/16] 0.0, 128
  %322 = vxpose.xlu0.b32.cont [15/16] 0.0, 128
  %323 = vxpose.xlu0.b32.end [16/16] 0.0, 128
  %v324 = vpop.trf.xlu0
  %v325 = vpop.trf.xlu0
  %v326 = vpop.trf.xlu0
  %v327 = vpop.trf.xlu0
  %v328 = vpop.trf.xlu0
  %v329 = vpop.trf.xlu0
  %v330 = vpop.trf.xlu0
  %v331 = vpop.trf.xlu0
  %v332 = vpop.trf.xlu0
  %v333 = vpop.trf.xlu0
  %v334 = vpop.trf.xlu0
  %v335 = vpop.trf.xlu0
  %v336 = vpop.trf.xlu0
  %v337 = vpop.trf.xlu0
  %v338 = vpop.trf.xlu0
  %v339 = vpop.trf.xlu0
  %vm340 = vcmask 64512
  %v342 = vsel %vm340, %v228, 0
  %v345 = vsel %vm340, %v229, 0
  %347 = vmatpush.msra.mxu0 0.0
  %348 = vmatpush.msra.mxu0 0.0
  %349 = vmatpush.msra.mxu0 0.0
  %350 = vmatpush.msra.mxu0 0.0
  %351 = vmatpush.msra.mxu0 0.0
  %352 = vmatpush.msra.mxu0 0.0
  %353 = vmatpush.msra.mxu0 0.0
  %354 = vmatpush.msra.mxu0 0.0
  %355 = vmatpush.msra.mxu0 0.0
  %356 = vmatpush.msra.mxu0 0.0
  %357 = vmatpush.msra.mxu0 0.0
  %358 = vmatpush.msra.mxu0 0.0
  %359 = vmatpush.msra.mxu0 0.0
  %360 = vmatpush.msra.mxu0 0.0
  %361 = vmatpush.msra.mxu0 0.0
  %362 = vmatpush.msra.mxu0 %v187
  %363 = vmatmul.f32.gmra.mxu0 %v342
  %v364 = vpop.f32.mrf.mxu0
  %v365 = vadd.f32 %v210, %v364
  %366 = vmatmul.f32.gmra.mxu0 %v345
  %v367 = vpop.f32.mrf.mxu0
  %v368 = vadd.f32 %v211, %v367
  %369 = vdwg.mxu0
  %v371 = vsel %vm340, %v260, 0
  %v374 = vsel %vm340, %v261, 0
  %376 = vmatpush.msra.mxu0 0.0
  %377 = vmatpush.msra.mxu0 0.0
  %378 = vmatpush.msra.mxu0 0.0
  %379 = vmatpush.msra.mxu0 0.0
  %380 = vmatpush.msra.mxu0 0.0
  %381 = vmatpush.msra.mxu0 0.0
  %382 = vmatpush.msra.mxu0 0.0
  %383 = vmatpush.msra.mxu0 0.0
  %384 = vmatpush.msra.mxu0 0.0
  %385 = vmatpush.msra.mxu0 0.0
  %386 = vmatpush.msra.mxu0 0.0
  %387 = vmatpush.msra.mxu0 0.0
  %388 = vmatpush.msra.mxu0 0.0
  %389 = vmatpush.msra.mxu0 0.0
  %390 = vmatpush.msra.mxu0 0.0
  %391 = vmatpush.msra.mxu0 %v190
  %392 = vmatmul.f32.gmra.mxu0 %v371
  %v393 = vpop.f32.mrf.mxu0
  %v394 = vadd.f32 %v210, %v393
  %395 = vmatmul.f32.gmra.mxu0 %v374
  %v396 = vpop.f32.mrf.mxu0
  %v397 = vadd.f32 %v211, %v396
  %398 = vdwg.mxu0
  %v400 = vsel %vm340, %v292, 0
  %v403 = vsel %vm340, %v293, 0
  %405 = vmatpush.msra.mxu0 0.0
  %406 = vmatpush.msra.mxu0 0.0
  %407 = vmatpush.msra.mxu0 0.0
  %408 = vmatpush.msra.mxu0 0.0
  %409 = vmatpush.msra.mxu0 0.0
  %410 = vmatpush.msra.mxu0 0.0
  %411 = vmatpush.msra.mxu0 0.0
  %412 = vmatpush.msra.mxu0 0.0
  %413 = vmatpush.msra.mxu0 0.0
  %414 = vmatpush.msra.mxu0 0.0
  %415 = vmatpush.msra.mxu0 0.0
  %416 = vmatpush.msra.mxu0 0.0
  %417 = vmatpush.msra.mxu0 0.0
  %418 = vmatpush.msra.mxu0 0.0
  %419 = vmatpush.msra.mxu0 0.0
  %420 = vmatpush.msra.mxu0 %v193
  %421 = vmatmul.f32.gmra.mxu0 %v400
  %v422 = vpop.f32.mrf.mxu0
  %v423 = vadd.f32 %v210, %v422
  %424 = vmatmul.f32.gmra.mxu0 %v403
  %v425 = vpop.f32.mrf.mxu0
  %v426 = vadd.f32 %v211, %v425
  %427 = vdwg.mxu0
  %v429 = vsel %vm340, %v324, 0
  %v432 = vsel %vm340, %v325, 0
  %434 = vmatpush.msra.mxu0 0.0
  %435 = vmatpush.msra.mxu0 0.0
  %436 = vmatpush.msra.mxu0 0.0
  %437 = vmatpush.msra.mxu0 0.0
  %438 = vmatpush.msra.mxu0 0.0
  %439 = vmatpush.msra.mxu0 0.0
  %440 = vmatpush.msra.mxu0 0.0
  %441 = vmatpush.msra.mxu0 0.0
  %442 = vmatpush.msra.mxu0 0.0
  %443 = vmatpush.msra.mxu0 0.0
  %444 = vmatpush.msra.mxu0 0.0
  %445 = vmatpush.msra.mxu0 0.0
  %446 = vmatpush.msra.mxu0 0.0
  %447 = vmatpush.msra.mxu0 0.0
  %448 = vmatpush.msra.mxu0 0.0
  %449 = vmatpush.msra.mxu0 %v196
  %450 = vmatmul.f32.gmra.mxu0 %v429
  %v451 = vpop.f32.mrf.mxu0
  %v452 = vadd.f32 %v210, %v451
  %453 = vmatmul.f32.gmra.mxu0 %v432
  %v454 = vpop.f32.mrf.mxu0
  %v455 = vadd.f32 %v211, %v454
  %456 = vdwg.mxu0
  %vm457 = vcmask 130048
  %v458 = vsel %vm457, %v365, -inf
  %459 = vmax.xlane.f32.xlu0 %v458
  %v460 = vpop.xlane.xlu0 %459
  %v461 = vsel %vm457, %v368, -inf
  %462 = vmax.xlane.f32.xlu0 %v461
  %v463 = vpop.xlane.xlu0 %462
  %v464 = vsel %vm457, %v394, -inf
  %465 = vmax.xlane.f32.xlu0 %v464
  %v466 = vpop.xlane.xlu0 %465
  %v467 = vsel %vm457, %v397, -inf
  %468 = vmax.xlane.f32.xlu0 %v467
  %v469 = vpop.xlane.xlu0 %468
  %v470 = vsel %vm457, %v423, -inf
  %471 = vmax.xlane.f32.xlu0 %v470
  %v472 = vpop.xlane.xlu0 %471
  %v473 = vsel %vm457, %v426, -inf
  %474 = vmax.xlane.f32.xlu0 %v473
  %v475 = vpop.xlane.xlu0 %474
  %v476 = vsel %vm457, %v452, -inf
  %477 = vmax.xlane.f32.xlu0 %v476
  %v478 = vpop.xlane.xlu0 %477
  %v479 = vsel %vm457, %v455, -inf
  %480 = vmax.xlane.f32.xlu0 %v479
  %v481 = vpop.xlane.xlu0 %480
  %v482 = vsub.f32 %v365, %v460
  %v483 = vsub.f32 %v368, %v463
  %v484 = vsub.f32 %v394, %v466
  %v485 = vsub.f32 %v397, %v469
  %v486 = vsub.f32 %v423, %v472
  %v487 = vsub.f32 %v426, %v475
  %v488 = vsub.f32 %v452, %v478
  %v489 = vsub.f32 %v455, %v481
  %v490 = vmul.f32 %v482, 1.442695
  %v491 = vpow.pop %v490
  %v492 = vmul.f32 %v483, 1.442695
  %v493 = vpow.pop %v492
  %v494 = vmul.f32 %v484, 1.442695
  %v495 = vpow.pop %v494
  %v496 = vmul.f32 %v485, 1.442695
  %v497 = vpow.pop %v496
  %v498 = vmul.f32 %v486, 1.442695
  %v499 = vpow.pop %v498
  %v500 = vmul.f32 %v487, 1.442695
  %v501 = vpow.pop %v500
  %v502 = vmul.f32 %v488, 1.442695
  %v503 = vpow.pop %v502
  %v504 = vmul.f32 %v489, 1.442695
  %v505 = vpow.pop %v504
  %v506 = vsel %vm457, %v491, 0.0
  %507 = vadd.xlane.f32.xlu0 %v506
  %v508 = vpop.xlane.xlu0 %507
  %v509 = vsel %vm457, %v493, 0.0
  %510 = vadd.xlane.f32.xlu0 %v509
  %v511 = vpop.xlane.xlu0 %510
  %v512 = vsel %vm457, %v495, 0.0
  %513 = vadd.xlane.f32.xlu0 %v512
  %v514 = vpop.xlane.xlu0 %513
  %v515 = vsel %vm457, %v497, 0.0
  %516 = vadd.xlane.f32.xlu0 %v515
  %v517 = vpop.xlane.xlu0 %516
  %v518 = vsel %vm457, %v499, 0.0
  %519 = vadd.xlane.f32.xlu0 %v518
  %v520 = vpop.xlane.xlu0 %519
  %v521 = vsel %vm457, %v501, 0.0
  %522 = vadd.xlane.f32.xlu0 %v521
  %v523 = vpop.xlane.xlu0 %522
  %v524 = vsel %vm457, %v503, 0.0
  %525 = vadd.xlane.f32.xlu0 %v524
  %v526 = vpop.xlane.xlu0 %525
  %v527 = vsel %vm457, %v505, 0.0
  %528 = vadd.xlane.f32.xlu0 %v527
  %v529 = vpop.xlane.xlu0 %528
  %v530 = vrcp.pop %v508
  %v531 = vrcp.pop %v511
  %v532 = vrcp.pop %v514
  %v533 = vrcp.pop %v517
  %v534 = vrcp.pop %v520
  %v535 = vrcp.pop %v523
  %v536 = vrcp.pop %v526
  %v537 = vrcp.pop %v529
  %v538 = vmul.f32 %v491, %v530
  %v539 = vmul.f32 %v493, %v531
  %v540 = vmul.f32 %v495, %v532
  %v541 = vmul.f32 %v497, %v533
  %v542 = vmul.f32 %v499, %v534
  %v543 = vmul.f32 %v501, %v535
  %v544 = vmul.f32 %v503, %v536
  %v545 = vmul.f32 %v505, %v537
  %v547 = vsel %vm457, %v199, 0
  %v550 = vsel %vm457, %v538, 0
  %v553 = vsel %vm457, %v539, 0
  %555 = vmatpush.xpose.msra.mxu0 0.0
  %556 = vmatpush.xpose.msra.mxu0 0.0
  %557 = vmatpush.xpose.msra.mxu0 0.0
  %558 = vmatpush.xpose.msra.mxu0 0.0
  %559 = vmatpush.xpose.msra.mxu0 0.0
  %560 = vmatpush.xpose.msra.mxu0 0.0
  %561 = vmatpush.xpose.msra.mxu0 0.0
  %562 = vmatpush.xpose.msra.mxu0 0.0
  %563 = vmatpush.xpose.msra.mxu0 0.0
  %564 = vmatpush.xpose.msra.mxu0 0.0
  %565 = vmatpush.xpose.msra.mxu0 0.0
  %566 = vmatpush.xpose.msra.mxu0 0.0
  %567 = vmatpush.xpose.msra.mxu0 0.0
  %568 = vmatpush.xpose.msra.mxu0 0.0
  %569 = vmatpush.xpose.msra.mxu0 %v553
  %570 = vmatpush.xpose.msra.mxu0 %v550
  %571 = vmatmul.f32.gmra.mxu0 %v547
  %v572 = vpop.f32.mrf.mxu0
  %v573 = vadd.f32 0.0, %v572
  %574 = vdwg.mxu0
  %v576 = vsel %vm457, %v202, 0
  %v579 = vsel %vm457, %v540, 0
  %v582 = vsel %vm457, %v541, 0
  %584 = vmatpush.xpose.msra.mxu0 0.0
  %585 = vmatpush.xpose.msra.mxu0 0.0
  %586 = vmatpush.xpose.msra.mxu0 0.0
  %587 = vmatpush.xpose.msra.mxu0 0.0
  %588 = vmatpush.xpose.msra.mxu0 0.0
  %589 = vmatpush.xpose.msra.mxu0 0.0
  %590 = vmatpush.xpose.msra.mxu0 0.0
  %591 = vmatpush.xpose.msra.mxu0 0.0
  %592 = vmatpush.xpose.msra.mxu0 0.0
  %593 = vmatpush.xpose.msra.mxu0 0.0
  %594 = vmatpush.xpose.msra.mxu0 0.0
  %595 = vmatpush.xpose.msra.mxu0 0.0
  %596 = vmatpush.xpose.msra.mxu0 0.0
  %597 = vmatpush.xpose.msra.mxu0 0.0
  %598 = vmatpush.xpose.msra.mxu0 %v582
  %599 = vmatpush.xpose.msra.mxu0 %v579
  %600 = vmatmul.f32.gmra.mxu0 %v576
  %v601 = vpop.f32.mrf.mxu0
  %v602 = vadd.f32 0.0, %v601
  %603 = vdwg.mxu0
  %v605 = vsel %vm457, %v205, 0
  %v608 = vsel %vm457, %v542, 0
  %v611 = vsel %vm457, %v543, 0
  %613 = vmatpush.xpose.msra.mxu0 0.0
  %614 = vmatpush.xpose.msra.mxu0 0.0
  %615 = vmatpush.xpose.msra.mxu0 0.0
  %616 = vmatpush.xpose.msra.mxu0 0.0
  %617 = vmatpush.xpose.msra.mxu0 0.0
  %618 = vmatpush.xpose.msra.mxu0 0.0
  %619 = vmatpush.xpose.msra.mxu0 0.0
  %620 = vmatpush.xpose.msra.mxu0 0.0
  %621 = vmatpush.xpose.msra.mxu0 0.0
  %622 = vmatpush.xpose.msra.mxu0 0.0
  %623 = vmatpush.xpose.msra.mxu0 0.0
  %624 = vmatpush.xpose.msra.mxu0 0.0
  %625 = vmatpush.xpose.msra.mxu0 0.0
  %626 = vmatpush.xpose.msra.mxu0 0.0
  %627 = vmatpush.xpose.msra.mxu0 %v611
  %628 = vmatpush.xpose.msra.mxu0 %v608
  %629 = vmatmul.f32.gmra.mxu0 %v605
  %v630 = vpop.f32.mrf.mxu0
  %v631 = vadd.f32 0.0, %v630
  %632 = vdwg.mxu0
  %v634 = vsel %vm457, %v208, 0
  %v637 = vsel %vm457, %v544, 0
  %v640 = vsel %vm457, %v545, 0
  %642 = vmatpush.xpose.msra.mxu0 0.0
  %643 = vmatpush.xpose.msra.mxu0 0.0
  %644 = vmatpush.xpose.msra.mxu0 0.0
  %645 = vmatpush.xpose.msra.mxu0 0.0
  %646 = vmatpush.xpose.msra.mxu0 0.0
  %647 = vmatpush.xpose.msra.mxu0 0.0
  %648 = vmatpush.xpose.msra.mxu0 0.0
  %649 = vmatpush.xpose.msra.mxu0 0.0
  %650 = vmatpush.xpose.msra.mxu0 0.0
  %651 = vmatpush.xpose.msra.mxu0 0.0
  %652 = vmatpush.xpose.msra.mxu0 0.0
  %653 = vmatpush.xpose.msra.mxu0 0.0
  %654 = vmatpush.xpose.msra.mxu0 0.0
  %655 = vmatpush.xpose.msra.mxu0 0.0
  %656 = vmatpush.xpose.msra.mxu0 %v640
  %657 = vmatpush.xpose.msra.mxu0 %v637
  %658 = vmatmul.f32.gmra.mxu0 %v634
  %v659 = vpop.f32.mrf.mxu0
  %v660 = vadd.f32 0.0, %v659
  %661 = vdwg.mxu0
  %v662 = vld [vmem:[%s4 + $0x60] sm:$0xff]
  %v663 = vld [vmem:[%s4 + $0x68] sm:$0xff]
  %v664 = vld [vmem:[%s4 + $0x70] sm:$0xff]
  %v665 = vld [vmem:[%s4 + $0x78] sm:$0xff]
  %v666 = vld [vmem:[%s6 + $0x60] sm:$0xff]
  %v667 = vld [vmem:[%s6 + $0x68] sm:$0xff]
  %v668 = vld [vmem:[%s6 + $0x70] sm:$0xff]
  %v669 = vld [vmem:[%s6 + $0x78] sm:$0xff]
  %671 = vset.pattern.permute.xlu0 0
  %672 = vperm.xlu0 %671, %v666
  %v673 = vpop.permute.xlu0 %672
  %676 = vset.pattern.permute.xlu0 0
  %677 = vperm.xlu0 %676, %v667
  %v678 = vpop.permute.xlu0 %677
  %681 = vset.pattern.permute.xlu0 0
  %682 = vperm.xlu0 %681, %v668
  %v683 = vpop.permute.xlu0 %682
  %686 = vset.pattern.permute.xlu0 0
  %687 = vperm.xlu0 %686, %v669
  %v688 = vpop.permute.xlu0 %687
  %v691 = vsel %vm120, %v662, 0
  %v694 = vsel %vm120, %v663, 0
  %v697 = vsel %vm120, %v664, 0
  %v700 = vsel %vm120, %v665, 0
  %702 = vmatpush.msra.mxu0 0.0
  %703 = vmatpush.msra.mxu0 0.0
  %704 = vmatpush.msra.mxu0 0.0
  %705 = vmatpush.msra.mxu0 0.0
  %706 = vmatpush.msra.mxu0 0.0
  %707 = vmatpush.msra.mxu0 0.0
  %708 = vmatpush.msra.mxu0 0.0
  %709 = vmatpush.msra.mxu0 0.0
  %710 = vmatpush.msra.mxu0 0.0
  %711 = vmatpush.msra.mxu0 0.0
  %712 = vmatpush.msra.mxu0 0.0
  %713 = vmatpush.msra.mxu0 0.0
  %714 = vmatpush.msra.mxu0 %v660
  %715 = vmatpush.msra.mxu0 %v631
  %716 = vmatpush.msra.mxu0 %v602
  %717 = vmatpush.msra.mxu0 %v573
  %718 = vmatmul.f32.gmra.mxu0 %v691
  %v719 = vpop.f32.mrf.mxu0
  %v720 = vadd.f32 %v673, %v719
  %721 = vmatmul.f32.gmra.mxu0 %v694
  %v722 = vpop.f32.mrf.mxu0
  %v723 = vadd.f32 %v678, %v722
  %724 = vmatmul.f32.gmra.mxu0 %v697
  %v725 = vpop.f32.mrf.mxu0
  %v726 = vadd.f32 %v683, %v725
  %727 = vmatmul.f32.gmra.mxu0 %v700
  %v728 = vpop.f32.mrf.mxu0
  %v729 = vadd.f32 %v688, %v728
  %730 = vdwg.mxu0
  %v731 = vadd.f32 %v28, %v720
  %v732 = vadd.f32 %v29, %v723
  %v733 = vadd.f32 %v30, %v726
  %v734 = vadd.f32 %v31, %v729
  %v735 = vld [vmem:[%s6 + $0x80] sm:$0xff]
  %v736 = vld [vmem:[%s6 + $0x88] sm:$0xff]
  %v737 = vld [vmem:[%s6 + $0x90] sm:$0xff]
  %v738 = vld [vmem:[%s6 + $0x98] sm:$0xff]
  %v739 = vld [vmem:[%s6 + $0xa0] sm:$0xff]
  %v740 = vld [vmem:[%s6 + $0xa8] sm:$0xff]
  %v741 = vld [vmem:[%s6 + $0xb0] sm:$0xff]
  %v742 = vld [vmem:[%s6 + $0xb8] sm:$0xff]
  %v743 = vsel %vm457, %v731, 0.0
  %v744 = vsel %vm457, %v732, 0.0
  %v745 = vadd.f32 %v743, %v744
  %v746 = vsel %vm457, %v733, 0.0
  %v747 = vadd.f32 %v745, %v746
  %v748 = vsel %vm457, %v734, 0.0
  %v749 = vadd.f32 %v747, %v748
  %v750 = vrot.slane %v749, 4
  %v751 = vadd.f32 %v749, %v750
  %v752 = vrot.slane %v751, 2
  %v753 = vadd.f32 %v751, %v752
  %v754 = vrot.slane %v753, 1
  %v755 = vadd.f32 %v753, %v754
  %v756 = vrcp.pop 32.0
  %v757 = vmul.f32 32.0, %v756
  %v758 = vsub.f32 1.0, %v757
  %v759 = vmul.f32 %v756, %v758
  %v760 = vadd.f32 %v756, %v759
  %vm761 = vweird.f32 %v756
  %v762 = vsel %vm761, %v756, %v760
  %v763 = vmul.f32 %v755, %v762
  %v764 = vsub.f32 %v731, %v763
  %v765 = vsub.f32 %v732, %v763
  %v766 = vsub.f32 %v733, %v763
  %v767 = vsub.f32 %v734, %v763
  %v768 = vmul.f32 %v764, %v764
  %v769 = vmul.f32 %v765, %v765
  %v770 = vmul.f32 %v766, %v766
  %v771 = vmul.f32 %v767, %v767
  %v772 = vsel %vm457, %v768, 0.0
  %v773 = vsel %vm457, %v769, 0.0
  %v774 = vadd.f32 %v772, %v773
  %v775 = vsel %vm457, %v770, 0.0
  %v776 = vadd.f32 %v774, %v775
  %v777 = vsel %vm457, %v771, 0.0
  %v778 = vadd.f32 %v776, %v777
  %v779 = vrot.slane %v778, 4
  %v780 = vadd.f32 %v778, %v779
  %v781 = vrot.slane %v780, 2
  %v782 = vadd.f32 %v780, %v781
  %v783 = vrot.slane %v782, 1
  %v784 = vadd.f32 %v782, %v783
  %v785 = vmul.f32 %v784, %v762
  %v786 = vadd.f32 %v785, 1e-05
  %v787 = vrsqrt.pop %v786
  %v788 = vmul.f32 %v787, %v786
  %v789 = vmul.f32 %v788, %v787
  %v790 = vmul.f32 0.5, %v789
  %v791 = vsub.f32 1.5, %v790
  %v792 = vmul.f32 %v787, %v791
  %vm793 = vweird.f32 %v786
  %vm794 = vweird.f32 %v787
  %vm795 = vmor %vm793, %vm794
  %v796 = vsel %vm795, %v787, %v792
  %v797 = vmul.f32 %v764, %v796
  %v798 = vmul.f32 %v765, %v796
  %v799 = vmul.f32 %v766, %v796
  %v800 = vmul.f32 %v767, %v796
  %802 = vset.pattern.permute.xlu0 0
  %803 = vperm.xlu0 %802, %v735
  %v804 = vpop.permute.xlu0 %803
  %807 = vset.pattern.permute.xlu0 0
  %808 = vperm.xlu0 %807, %v736
  %v809 = vpop.permute.xlu0 %808
  %812 = vset.pattern.permute.xlu0 0
  %813 = vperm.xlu0 %812, %v737
  %v814 = vpop.permute.xlu0 %813
  %817 = vset.pattern.permute.xlu0 0
  %818 = vperm.xlu0 %817, %v738
  %v819 = vpop.permute.xlu0 %818
  %v821 = vmul.f32 %v797, %v804
  %v822 = vmul.f32 %v798, %v809
  %v823 = vmul.f32 %v799, %v814
  %v824 = vmul.f32 %v800, %v819
  %826 = vset.pattern.permute.xlu0 0
  %827 = vperm.xlu0 %826, %v739
  %v828 = vpop.permute.xlu0 %827
  %831 = vset.pattern.permute.xlu0 0
  %832 = vperm.xlu0 %831, %v740
  %v833 = vpop.permute.xlu0 %832
  %836 = vset.pattern.permute.xlu0 0
  %837 = vperm.xlu0 %836, %v741
  %v838 = vpop.permute.xlu0 %837
  %841 = vset.pattern.permute.xlu0 0
  %842 = vperm.xlu0 %841, %v742
  %v843 = vpop.permute.xlu0 %842
  %v845 = vadd.f32 %v821, %v828
  %v846 = vadd.f32 %v822, %v833
  %v847 = vadd.f32 %v823, %v838
  %v848 = vadd.f32 %v824, %v843
  %v849 = vld [vmem:[%s4 + $0x80] sm:$0xff]
  %v850 = vld [vmem:[%s4 + $0x88] sm:$0xff]
  %v851 = vld [vmem:[%s4 + $0x90] sm:$0xff]
  %v852 = vld [vmem:[%s4 + $0x98] sm:$0xff]
  %v853 = vld [vmem:[%s6 + $0xc0] sm:$0xff]
  %v854 = vld [vmem:[%s6 + $0xc8] sm:$0xff]
  %v855 = vld [vmem:[%s6 + $0xd0] sm:$0xff]
  %v856 = vld [vmem:[%s6 + $0xd8] sm:$0xff]
  %858 = vset.pattern.permute.xlu0 0
  %859 = vperm.xlu0 %858, %v853
  %v860 = vpop.permute.xlu0 %859
  %863 = vset.pattern.permute.xlu0 0
  %864 = vperm.xlu0 %863, %v854
  %v865 = vpop.permute.xlu0 %864
  %868 = vset.pattern.permute.xlu0 0
  %869 = vperm.xlu0 %868, %v855
  %v870 = vpop.permute.xlu0 %869
  %873 = vset.pattern.permute.xlu0 0
  %874 = vperm.xlu0 %873, %v856
  %v875 = vpop.permute.xlu0 %874
  %v878 = vsel %vm120, %v849, 0
  %v881 = vsel %vm120, %v850, 0
  %v884 = vsel %vm120, %v851, 0
  %v887 = vsel %vm120, %v852, 0
  %889 = vmatpush.msra.mxu0 0.0
  %890 = vmatpush.msra.mxu0 0.0
  %891 = vmatpush.msra.mxu0 0.0
  %892 = vmatpush.msra.mxu0 0.0
  %893 = vmatpush.msra.mxu0 0.0
  %894 = vmatpush.msra.mxu0 0.0
  %895 = vmatpush.msra.mxu0 0.0
  %896 = vmatpush.msra.mxu0 0.0
  %897 = vmatpush.msra.mxu0 0.0
  %898 = vmatpush.msra.mxu0 0.0
  %899 = vmatpush.msra.mxu0 0.0
  %900 = vmatpush.msra.mxu0 0.0
  %901 = vmatpush.msra.mxu0 %v848
  %902 = vmatpush.msra.mxu0 %v847
  %903 = vmatpush.msra.mxu0 %v846
  %904 = vmatpush.msra.mxu0 %v845
  %905 = vmatmul.f32.gmra.mxu0 %v878
  %v906 = vpop.f32.mrf.mxu0
  %v907 = vadd.f32 %v860, %v906
  %908 = vmatmul.f32.gmra.mxu0 %v881
  %v909 = vpop.f32.mrf.mxu0
  %v910 = vadd.f32 %v865, %v909
  %911 = vmatmul.f32.gmra.mxu0 %v884
  %v912 = vpop.f32.mrf.mxu0
  %v913 = vadd.f32 %v870, %v912
  %914 = vmatmul.f32.gmra.mxu0 %v887
  %v915 = vpop.f32.mrf.mxu0
  %v916 = vadd.f32 %v875, %v915
  %917 = vdwg.mxu0
  %v918 = vld [vmem:[%s4 + $0xa0] sm:$0xff]
  %v919 = vld [vmem:[%s4 + $0xa8] sm:$0xff]
  %v920 = vld [vmem:[%s4 + $0xb0] sm:$0xff]
  %v921 = vld [vmem:[%s4 + $0xb8] sm:$0xff]
  %v922 = vld [vmem:[%s4 + $0xc0] sm:$0xff]
  %v923 = vld [vmem:[%s4 + $0xc8] sm:$0xff]
  %v924 = vld [vmem:[%s4 + $0xd0] sm:$0xff]
  %v925 = vld [vmem:[%s4 + $0xd8] sm:$0xff]
  %v926 = vld [vmem:[%s6 + $0xe0] sm:$0xff]
  %v927 = vld [vmem:[%s6 + $0xe8] sm:$0xff]
  %v928 = vld [vmem:[%s6 + $0xf0] sm:$0xff]
  %v929 = vld [vmem:[%s6 + $0xf8] sm:$0xff]
  %v930 = vld [vmem:[%s6 + $0x100] sm:$0xff]
  %v931 = vld [vmem:[%s6 + $0x108] sm:$0xff]
  %v932 = vld [vmem:[%s6 + $0x110] sm:$0xff]
  %v933 = vld [vmem:[%s6 + $0x118] sm:$0xff]
  %935 = vset.pattern.permute.xlu0 0
  %936 = vperm.xlu0 %935, %v926
  %v937 = vpop.permute.xlu0 %936
  %940 = vset.pattern.permute.xlu0 0
  %941 = vperm.xlu0 %940, %v927
  %v942 = vpop.permute.xlu0 %941
  %945 = vset.pattern.permute.xlu0 0
  %946 = vperm.xlu0 %945, %v928
  %v947 = vpop.permute.xlu0 %946
  %950 = vset.pattern.permute.xlu0 0
  %951 = vperm.xlu0 %950, %v929
  %v952 = vpop.permute.xlu0 %951
  %955 = vset.pattern.permute.xlu0 0
  %956 = vperm.xlu0 %955, %v930
  %v957 = vpop.permute.xlu0 %956
  %960 = vset.pattern.permute.xlu0 0
  %961 = vperm.xlu0 %960, %v931
  %v962 = vpop.permute.xlu0 %961
  %965 = vset.pattern.permute.xlu0 0
  %966 = vperm.xlu0 %965, %v932
  %v967 = vpop.permute.xlu0 %966
  %970 = vset.pattern.permute.xlu0 0
  %971 = vperm.xlu0 %970, %v933
  %v972 = vpop.permute.xlu0 %971
  %v975 = vsel %vm120, %v918, 0
  %v978 = vsel %vm120, %v919, 0
  %v981 = vsel %vm120, %v920, 0
  %v984 = vsel %vm120, %v921, 0
  %v987 = vsel %vm120, %v922, 0
  %v990 = vsel %vm120, %v923, 0
  %v993 = vsel %vm120, %v924, 0
  %v996 = vsel %vm120, %v925, 0
  %998 = vmatpush.msra.mxu0 0.0
  %999 = vmatpush.msra.mxu0 0.0
  %1000 = vmatpush.msra.mxu0 0.0
  %1001 = vmatpush.msra.mxu0 0.0
  %1002 = vmatpush.msra.mxu0 0.0
  %1003 = vmatpush.msra.mxu0 0.0
  %1004 = vmatpush.msra.mxu0 0.0
  %1005 = vmatpush.msra.mxu0 0.0
  %1006 = vmatpush.msra.mxu0 0.0
  %1007 = vmatpush.msra.mxu0 0.0
  %1008 = vmatpush.msra.mxu0 0.0
  %1009 = vmatpush.msra.mxu0 0.0
  %1010 = vmatpush.msra.mxu0 %v35
  %1011 = vmatpush.msra.mxu0 %v34
  %1012 = vmatpush.msra.mxu0 %v33
  %1013 = vmatpush.msra.mxu0 %v32
  %1014 = vmatmul.f32.gmra.mxu0 %v975
  %v1015 = vpop.f32.mrf.mxu0
  %v1016 = vadd.f32 %v937, %v1015
  %1017 = vmatmul.f32.gmra.mxu0 %v978
  %v1018 = vpop.f32.mrf.mxu0
  %v1019 = vadd.f32 %v942, %v1018
  %1020 = vmatmul.f32.gmra.mxu0 %v981
  %v1021 = vpop.f32.mrf.mxu0
  %v1022 = vadd.f32 %v947, %v1021
  %1023 = vmatmul.f32.gmra.mxu0 %v984
  %v1024 = vpop.f32.mrf.mxu0
  %v1025 = vadd.f32 %v952, %v1024
  %1026 = vmatmul.f32.gmra.mxu0 %v987
  %v1027 = vpop.f32.mrf.mxu0
  %v1028 = vadd.f32 %v957, %v1027
  %1029 = vmatmul.f32.gmra.mxu0 %v990
  %v1030 = vpop.f32.mrf.mxu0
  %v1031 = vadd.f32 %v962, %v1030
  %1032 = vmatmul.f32.gmra.mxu0 %v993
  %v1033 = vpop.f32.mrf.mxu0
  %v1034 = vadd.f32 %v967, %v1033
  %1035 = vmatmul.f32.gmra.mxu0 %v996
  %v1036 = vpop.f32.mrf.mxu0
  %v1037 = vadd.f32 %v972, %v1036
  %1038 = vdwg.mxu0
  %v1039 = vld [vmem:[%s3] sm:$0xff]
  %v1040 = vld [vmem:[%s3 + $0x8] sm:$0xff]
  %1041 = vxpose.xlu0.b32.start [1/16] %v907, 128
  %1042 = vxpose.xlu0.b32.cont [2/16] 0.0, 128
  %1043 = vxpose.xlu0.b32.cont [3/16] 0.0, 128
  %1044 = vxpose.xlu0.b32.cont [4/16] 0.0, 128
  %1045 = vxpose.xlu0.b32.cont [5/16] 0.0, 128
  %1046 = vxpose.xlu0.b32.cont [6/16] 0.0, 128
  %1047 = vxpose.xlu0.b32.cont [7/16] 0.0, 128
  %1048 = vxpose.xlu0.b32.cont [8/16] 0.0, 128
  %1049 = vxpose.xlu0.b32.cont [9/16] 0.0, 128
  %1050 = vxpose.xlu0.b32.cont [10/16] 0.0, 128
  %1051 = vxpose.xlu0.b32.cont [11/16] 0.0, 128
  %1052 = vxpose.xlu0.b32.cont [12/16] 0.0, 128
  %1053 = vxpose.xlu0.b32.cont [13/16] 0.0, 128
  %1054 = vxpose.xlu0.b32.cont [14/16] 0.0, 128
  %1055 = vxpose.xlu0.b32.cont [15/16] 0.0, 128
  %1056 = vxpose.xlu0.b32.end [16/16] 0.0, 128
  %v1057 = vpop.trf.xlu0
  %v1058 = vpop.trf.xlu0
  %v1059 = vpop.trf.xlu0
  %v1060 = vpop.trf.xlu0
  %v1061 = vpop.trf.xlu0
  %v1062 = vpop.trf.xlu0
  %v1063 = vpop.trf.xlu0
  %v1064 = vpop.trf.xlu0
  %v1065 = vpop.trf.xlu0
  %v1066 = vpop.trf.xlu0
  %v1067 = vpop.trf.xlu0
  %v1068 = vpop.trf.xlu0
  %v1069 = vpop.trf.xlu0
  %v1070 = vpop.trf.xlu0
  %v1071 = vpop.trf.xlu0
  %v1072 = vpop.trf.xlu0
  %1073 = vxpose.xlu0.b32.start [1/16] %v910, 128
  %1074 = vxpose.xlu0.b32.cont [2/16] 0.0, 128
  %1075 = vxpose.xlu0.b32.cont [3/16] 0.0, 128
  %1076 = vxpose.xlu0.b32.cont [4/16] 0.0, 128
  %1077 = vxpose.xlu0.b32.cont [5/16] 0.0, 128
  %1078 = vxpose.xlu0.b32.cont [6/16] 0.0, 128
  %1079 = vxpose.xlu0.b32.cont [7/16] 0.0, 128
  %1080 = vxpose.xlu0.b32.cont [8/16] 0.0, 128
  %1081 = vxpose.xlu0.b32.cont [9/16] 0.0, 128
  %1082 = vxpose.xlu0.b32.cont [10/16] 0.0, 128
  %1083 = vxpose.xlu0.b32.cont [11/16] 0.0, 128
  %1084 = vxpose.xlu0.b32.cont [12/16] 0.0, 128
  %1085 = vxpose.xlu0.b32.cont [13/16] 0.0, 128
  %1086 = vxpose.xlu0.b32.cont [14/16] 0.0, 128
  %1087 = vxpose.xlu0.b32.cont [15/16] 0.0, 128
  %1088 = vxpose.xlu0.b32.end [16/16] 0.0, 128
  %v1089 = vpop.trf.xlu0
  %v1090 = vpop.trf.xlu0
  %v1091 = vpop.trf.xlu0
  %v1092 = vpop.trf.xlu0
  %v1093 = vpop.trf.xlu0
  %v1094 = vpop.trf.xlu0
  %v1095 = vpop.trf.xlu0
  %v1096 = vpop.trf.xlu0
  %v1097 = vpop.trf.xlu0
  %v1098 = vpop.trf.xlu0
  %v1099 = vpop.trf.xlu0
  %v1100 = vpop.trf.xlu0
  %v1101 = vpop.trf.xlu0
  %v1102 = vpop.trf.xlu0
  %v1103 = vpop.trf.xlu0
  %v1104 = vpop.trf.xlu0
  %1105 = vxpose.xlu0.b32.start [1/16] %v913, 128
  %1106 = vxpose.xlu0.b32.cont [2/16] 0.0, 128
  %1107 = vxpose.xlu0.b32.cont [3/16] 0.0, 128
  %1108 = vxpose.xlu0.b32.cont [4/16] 0.0, 128
  %1109 = vxpose.xlu0.b32.cont [5/16] 0.0, 128
  %1110 = vxpose.xlu0.b32.cont [6/16] 0.0, 128
  %1111 = vxpose.xlu0.b32.cont [7/16] 0.0, 128
  %1112 = vxpose.xlu0.b32.cont [8/16] 0.0, 128
  %1113 = vxpose.xlu0.b32.cont [9/16] 0.0, 128
  %1114 = vxpose.xlu0.b32.cont [10/16] 0.0, 128
  %1115 = vxpose.xlu0.b32.cont [11/16] 0.0, 128
  %1116 = vxpose.xlu0.b32.cont [12/16] 0.0, 128
  %1117 = vxpose.xlu0.b32.cont [13/16] 0.0, 128
  %1118 = vxpose.xlu0.b32.cont [14/16] 0.0, 128
  %1119 = vxpose.xlu0.b32.cont [15/16] 0.0, 128
  %1120 = vxpose.xlu0.b32.end [16/16] 0.0, 128
  %v1121 = vpop.trf.xlu0
  %v1122 = vpop.trf.xlu0
  %v1123 = vpop.trf.xlu0
  %v1124 = vpop.trf.xlu0
  %v1125 = vpop.trf.xlu0
  %v1126 = vpop.trf.xlu0
  %v1127 = vpop.trf.xlu0
  %v1128 = vpop.trf.xlu0
  %v1129 = vpop.trf.xlu0
  %v1130 = vpop.trf.xlu0
  %v1131 = vpop.trf.xlu0
  %v1132 = vpop.trf.xlu0
  %v1133 = vpop.trf.xlu0
  %v1134 = vpop.trf.xlu0
  %v1135 = vpop.trf.xlu0
  %v1136 = vpop.trf.xlu0
  %1137 = vxpose.xlu0.b32.start [1/16] %v916, 128
  %1138 = vxpose.xlu0.b32.cont [2/16] 0.0, 128
  %1139 = vxpose.xlu0.b32.cont [3/16] 0.0, 128
  %1140 = vxpose.xlu0.b32.cont [4/16] 0.0, 128
  %1141 = vxpose.xlu0.b32.cont [5/16] 0.0, 128
  %1142 = vxpose.xlu0.b32.cont [6/16] 0.0, 128
  %1143 = vxpose.xlu0.b32.cont [7/16] 0.0, 128
  %1144 = vxpose.xlu0.b32.cont [8/16] 0.0, 128
  %1145 = vxpose.xlu0.b32.cont [9/16] 0.0, 128
  %1146 = vxpose.xlu0.b32.cont [10/16] 0.0, 128
  %1147 = vxpose.xlu0.b32.cont [11/16] 0.0, 128
  %1148 = vxpose.xlu0.b32.cont [12/16] 0.0, 128
  %1149 = vxpose.xlu0.b32.cont [13/16] 0.0, 128
  %1150 = vxpose.xlu0.b32.cont [14/16] 0.0, 128
  %1151 = vxpose.xlu0.b32.cont [15/16] 0.0, 128
  %1152 = vxpose.xlu0.b32.end [16/16] 0.0, 128
  %v1153 = vpop.trf.xlu0
  %v1154 = vpop.trf.xlu0
  %v1155 = vpop.trf.xlu0
  %v1156 = vpop.trf.xlu0
  %v1157 = vpop.trf.xlu0
  %v1158 = vpop.trf.xlu0
  %v1159 = vpop.trf.xlu0
  %v1160 = vpop.trf.xlu0
  %v1161 = vpop.trf.xlu0
  %v1162 = vpop.trf.xlu0
  %v1163 = vpop.trf.xlu0
  %v1164 = vpop.trf.xlu0
  %v1165 = vpop.trf.xlu0
  %v1166 = vpop.trf.xlu0
  %v1167 = vpop.trf.xlu0
  %v1168 = vpop.trf.xlu0
  %v1170 = vsel %vm340, %v1057, 0
  %v1173 = vsel %vm340, %v1058, 0
  %1175 = vmatpush.msra.mxu0 0.0
  %1176 = vmatpush.msra.mxu0 0.0
  %1177 = vmatpush.msra.mxu0 0.0
  %1178 = vmatpush.msra.mxu0 0.0
  %1179 = vmatpush.msra.mxu0 0.0
  %1180 = vmatpush.msra.mxu0 0.0
  %1181 = vmatpush.msra.mxu0 0.0
  %1182 = vmatpush.msra.mxu0 0.0
  %1183 = vmatpush.msra.mxu0 0.0
  %1184 = vmatpush.msra.mxu0 0.0
  %1185 = vmatpush.msra.mxu0 0.0
  %1186 = vmatpush.msra.mxu0 0.0
  %1187 = vmatpush.msra.mxu0 0.0
  %1188 = vmatpush.msra.mxu0 0.0
  %1189 = vmatpush.msra.mxu0 0.0
  %1190 = vmatpush.msra.mxu0 %v1016
  %1191 = vmatmul.f32.gmra.mxu0 %v1170
  %v1192 = vpop.f32.mrf.mxu0
  %v1193 = vadd.f32 %v1039, %v1192
  %1194 = vmatmul.f32.gmra.mxu0 %v1173
  %v1195 = vpop.f32.mrf.mxu0
  %v1196 = vadd.f32 %v1040, %v1195
  %1197 = vdwg.mxu0
  %v1199 = vsel %vm340, %v1089, 0
  %v1202 = vsel %vm340, %v1090, 0
  %1204 = vmatpush.msra.mxu0 0.0
  %1205 = vmatpush.msra.mxu0 0.0
  %1206 = vmatpush.msra.mxu0 0.0
  %1207 = vmatpush.msra.mxu0 0.0
  %1208 = vmatpush.msra.mxu0 0.0
  %1209 = vmatpush.msra.mxu0 0.0
  %1210 = vmatpush.msra.mxu0 0.0
  %1211 = vmatpush.msra.mxu0 0.0
  %1212 = vmatpush.msra.mxu0 0.0
  %1213 = vmatpush.msra.mxu0 0.0
  %1214 = vmatpush.msra.mxu0 0.0
  %1215 = vmatpush.msra.mxu0 0.0
  %1216 = vmatpush.msra.mxu0 0.0
  %1217 = vmatpush.msra.mxu0 0.0
  %1218 = vmatpush.msra.mxu0 0.0
  %1219 = vmatpush.msra.mxu0 %v1019
  %1220 = vmatmul.f32.gmra.mxu0 %v1199
  %v1221 = vpop.f32.mrf.mxu0
  %v1222 = vadd.f32 %v1039, %v1221
  %1223 = vmatmul.f32.gmra.mxu0 %v1202
  %v1224 = vpop.f32.mrf.mxu0
  %v1225 = vadd.f32 %v1040, %v1224
  %1226 = vdwg.mxu0
  %v1228 = vsel %vm340, %v1121, 0
  %v1231 = vsel %vm340, %v1122, 0
  %1233 = vmatpush.msra.mxu0 0.0
  %1234 = vmatpush.msra.mxu0 0.0
  %1235 = vmatpush.msra.mxu0 0.0
  %1236 = vmatpush.msra.mxu0 0.0
  %1237 = vmatpush.msra.mxu0 0.0
  %1238 = vmatpush.msra.mxu0 0.0
  %1239 = vmatpush.msra.mxu0 0.0
  %1240 = vmatpush.msra.mxu0 0.0
  %1241 = vmatpush.msra.mxu0 0.0
  %1242 = vmatpush.msra.mxu0 0.0
  %1243 = vmatpush.msra.mxu0 0.0
  %1244 = vmatpush.msra.mxu0 0.0
  %1245 = vmatpush.msra.mxu0 0.0
  %1246 = vmatpush.msra.mxu0 0.0
  %1247 = vmatpush.msra.mxu0 0.0
  %1248 = vmatpush.msra.mxu0 %v1022
  %1249 = vmatmul.f32.gmra.mxu0 %v1228
  %v1250 = vpop.f32.mrf.mxu0
  %v1251 = vadd.f32 %v1039, %v1250
  %1252 = vmatmul.f32.gmra.mxu0 %v1231
  %v1253 = vpop.f32.mrf.mxu0
  %v1254 = vadd.f32 %v1040, %v1253
  %1255 = vdwg.mxu0
  %v1257 = vsel %vm340, %v1153, 0
  %v1260 = vsel %vm340, %v1154, 0
  %1262 = vmatpush.msra.mxu0 0.0
  %1263 = vmatpush.msra.mxu0 0.0
  %1264 = vmatpush.msra.mxu0 0.0
  %1265 = vmatpush.msra.mxu0 0.0
  %1266 = vmatpush.msra.mxu0 0.0
  %1267 = vmatpush.msra.mxu0 0.0
  %1268 = vmatpush.msra.mxu0 0.0
  %1269 = vmatpush.msra.mxu0 0.0
  %1270 = vmatpush.msra.mxu0 0.0
  %1271 = vmatpush.msra.mxu0 0.0
  %1272 = vmatpush.msra.mxu0 0.0
  %1273 = vmatpush.msra.mxu0 0.0
  %1274 = vmatpush.msra.mxu0 0.0
  %1275 = vmatpush.msra.mxu0 0.0
  %1276 = vmatpush.msra.mxu0 0.0
  %1277 = vmatpush.msra.mxu0 %v1025
  %1278 = vmatmul.f32.gmra.mxu0 %v1257
  %v1279 = vpop.f32.mrf.mxu0
  %v1280 = vadd.f32 %v1039, %v1279
  %1281 = vmatmul.f32.gmra.mxu0 %v1260
  %v1282 = vpop.f32.mrf.mxu0
  %v1283 = vadd.f32 %v1040, %v1282
  %1284 = vdwg.mxu0
  %vm1285 = vcmask 162816
  %v1286 = vsel %vm1285, %v1193, -inf
  %1287 = vmax.xlane.f32.xlu0 %v1286
  %v1288 = vpop.xlane.xlu0 %1287
  %v1289 = vsel %vm1285, %v1196, -inf
  %1290 = vmax.xlane.f32.xlu0 %v1289
  %v1291 = vpop.xlane.xlu0 %1290
  %v1292 = vsel %vm1285, %v1222, -inf
  %1293 = vmax.xlane.f32.xlu0 %v1292
  %v1294 = vpop.xlane.xlu0 %1293
  %v1295 = vsel %vm1285, %v1225, -inf
  %1296 = vmax.xlane.f32.xlu0 %v1295
  %v1297 = vpop.xlane.xlu0 %1296
  %v1298 = vsel %vm1285, %v1251, -inf
  %1299 = vmax.xlane.f32.xlu0 %v1298
  %v1300 = vpop.xlane.xlu0 %1299
  %v1301 = vsel %vm1285, %v1254, -inf
  %1302 = vmax.xlane.f32.xlu0 %v1301
  %v1303 = vpop.xlane.xlu0 %1302
  %v1304 = vsel %vm1285, %v1280, -inf
  %1305 = vmax.xlane.f32.xlu0 %v1304
  %v1306 = vpop.xlane.xlu0 %1305
  %v1307 = vsel %vm1285, %v1283, -inf
  %1308 = vmax.xlane.f32.xlu0 %v1307
  %v1309 = vpop.xlane.xlu0 %1308
  %v1310 = vsub.f32 %v1193, %v1288
  %v1311 = vsub.f32 %v1196, %v1291
  %v1312 = vsub.f32 %v1222, %v1294
  %v1313 = vsub.f32 %v1225, %v1297
  %v1314 = vsub.f32 %v1251, %v1300
  %v1315 = vsub.f32 %v1254, %v1303
  %v1316 = vsub.f32 %v1280, %v1306
  %v1317 = vsub.f32 %v1283, %v1309
  %v1318 = vmul.f32 %v1310, 1.442695
  %v1319 = vpow.pop %v1318
  %v1320 = vmul.f32 %v1311, 1.442695
  %v1321 = vpow.pop %v1320
  %v1322 = vmul.f32 %v1312, 1.442695
  %v1323 = vpow.pop %v1322
  %v1324 = vmul.f32 %v1313, 1.442695
  %v1325 = vpow.pop %v1324
  %v1326 = vmul.f32 %v1314, 1.442695
  %v1327 = vpow.pop %v1326
  %v1328 = vmul.f32 %v1315, 1.442695
  %v1329 = vpow.pop %v1328
  %v1330 = vmul.f32 %v1316, 1.442695
  %v1331 = vpow.pop %v1330
  %v1332 = vmul.f32 %v1317, 1.442695
  %v1333 = vpow.pop %v1332
  %v1334 = vsel %vm1285, %v1319, 0.0
  %1335 = vadd.xlane.f32.xlu0 %v1334
  %v1336 = vpop.xlane.xlu0 %1335
  %v1337 = vsel %vm1285, %v1321, 0.0
  %1338 = vadd.xlane.f32.xlu0 %v1337
  %v1339 = vpop.xlane.xlu0 %1338
  %v1340 = vsel %vm1285, %v1323, 0.0
  %1341 = vadd.xlane.f32.xlu0 %v1340
  %v1342 = vpop.xlane.xlu0 %1341
  %v1343 = vsel %vm1285, %v1325, 0.0
  %1344 = vadd.xlane.f32.xlu0 %v1343
  %v1345 = vpop.xlane.xlu0 %1344
  %v1346 = vsel %vm1285, %v1327, 0.0
  %1347 = vadd.xlane.f32.xlu0 %v1346
  %v1348 = vpop.xlane.xlu0 %1347
  %v1349 = vsel %vm1285, %v1329, 0.0
  %1350 = vadd.xlane.f32.xlu0 %v1349
  %v1351 = vpop.xlane.xlu0 %1350
  %v1352 = vsel %vm1285, %v1331, 0.0
  %1353 = vadd.xlane.f32.xlu0 %v1352
  %v1354 = vpop.xlane.xlu0 %1353
  %v1355 = vsel %vm1285, %v1333, 0.0
  %1356 = vadd.xlane.f32.xlu0 %v1355
  %v1357 = vpop.xlane.xlu0 %1356
  %v1358 = vrcp.pop %v1336
  %v1359 = vrcp.pop %v1339
  %v1360 = vrcp.pop %v1342
  %v1361 = vrcp.pop %v1345
  %v1362 = vrcp.pop %v1348
  %v1363 = vrcp.pop %v1351
  %v1364 = vrcp.pop %v1354
  %v1365 = vrcp.pop %v1357
  %v1366 = vmul.f32 %v1319, %v1358
  %v1367 = vmul.f32 %v1321, %v1359
  %v1368 = vmul.f32 %v1323, %v1360
  %v1369 = vmul.f32 %v1325, %v1361
  %v1370 = vmul.f32 %v1327, %v1362
  %v1371 = vmul.f32 %v1329, %v1363
  %v1372 = vmul.f32 %v1331, %v1364
  %v1373 = vmul.f32 %v1333, %v1365
  %v1375 = vsel %vm1285, %v1028, 0
  %v1378 = vsel %vm1285, %v1366, 0
  %v1381 = vsel %vm1285, %v1367, 0
  %1383 = vmatpush.xpose.msra.mxu0 0.0
  %1384 = vmatpush.xpose.msra.mxu0 0.0
  %1385 = vmatpush.xpose.msra.mxu0 0.0
  %1386 = vmatpush.xpose.msra.mxu0 0.0
  %1387 = vmatpush.xpose.msra.mxu0 0.0
  %1388 = vmatpush.xpose.msra.mxu0 0.0
  %1389 = vmatpush.xpose.msra.mxu0 0.0
  %1390 = vmatpush.xpose.msra.mxu0 0.0
  %1391 = vmatpush.xpose.msra.mxu0 0.0
  %1392 = vmatpush.xpose.msra.mxu0 0.0
  %1393 = vmatpush.xpose.msra.mxu0 0.0
  %1394 = vmatpush.xpose.msra.mxu0 0.0
  %1395 = vmatpush.xpose.msra.mxu0 0.0
  %1396 = vmatpush.xpose.msra.mxu0 0.0
  %1397 = vmatpush.xpose.msra.mxu0 %v1381
  %1398 = vmatpush.xpose.msra.mxu0 %v1378
  %1399 = vmatmul.f32.gmra.mxu0 %v1375
  %v1400 = vpop.f32.mrf.mxu0
  %v1401 = vadd.f32 0.0, %v1400
  %1402 = vdwg.mxu0
  %v1404 = vsel %vm1285, %v1031, 0
  %v1407 = vsel %vm1285, %v1368, 0
  %v1410 = vsel %vm1285, %v1369, 0
  %1412 = vmatpush.xpose.msra.mxu0 0.0
  %1413 = vmatpush.xpose.msra.mxu0 0.0
  %1414 = vmatpush.xpose.msra.mxu0 0.0
  %1415 = vmatpush.xpose.msra.mxu0 0.0
  %1416 = vmatpush.xpose.msra.mxu0 0.0
  %1417 = vmatpush.xpose.msra.mxu0 0.0
  %1418 = vmatpush.xpose.msra.mxu0 0.0
  %1419 = vmatpush.xpose.msra.mxu0 0.0
  %1420 = vmatpush.xpose.msra.mxu0 0.0
  %1421 = vmatpush.xpose.msra.mxu0 0.0
  %1422 = vmatpush.xpose.msra.mxu0 0.0
  %1423 = vmatpush.xpose.msra.mxu0 0.0
  %1424 = vmatpush.xpose.msra.mxu0 0.0
  %1425 = vmatpush.xpose.msra.mxu0 0.0
  %1426 = vmatpush.xpose.msra.mxu0 %v1410
  %1427 = vmatpush.xpose.msra.mxu0 %v1407
  %1428 = vmatmul.f32.gmra.mxu0 %v1404
  %v1429 = vpop.f32.mrf.mxu0
  %v1430 = vadd.f32 0.0, %v1429
  %1431 = vdwg.mxu0
  %v1433 = vsel %vm1285, %v1034, 0
  %v1436 = vsel %vm1285, %v1370, 0
  %v1439 = vsel %vm1285, %v1371, 0
  %1441 = vmatpush.xpose.msra.mxu0 0.0
  %1442 = vmatpush.xpose.msra.mxu0 0.0
  %1443 = vmatpush.xpose.msra.mxu0 0.0
  %1444 = vmatpush.xpose.msra.mxu0 0.0
  %1445 = vmatpush.xpose.msra.mxu0 0.0
  %1446 = vmatpush.xpose.msra.mxu0 0.0
  %1447 = vmatpush.xpose.msra.mxu0 0.0
  %1448 = vmatpush.xpose.msra.mxu0 0.0
  %1449 = vmatpush.xpose.msra.mxu0 0.0
  %1450 = vmatpush.xpose.msra.mxu0 0.0
  %1451 = vmatpush.xpose.msra.mxu0 0.0
  %1452 = vmatpush.xpose.msra.mxu0 0.0
  %1453 = vmatpush.xpose.msra.mxu0 0.0
  %1454 = vmatpush.xpose.msra.mxu0 0.0
  %1455 = vmatpush.xpose.msra.mxu0 %v1439
  %1456 = vmatpush.xpose.msra.mxu0 %v1436
  %1457 = vmatmul.f32.gmra.mxu0 %v1433
  %v1458 = vpop.f32.mrf.mxu0
  %v1459 = vadd.f32 0.0, %v1458
  %1460 = vdwg.mxu0
  %v1462 = vsel %vm1285, %v1037, 0
  %v1465 = vsel %vm1285, %v1372, 0
  %v1468 = vsel %vm1285, %v1373, 0
  %1470 = vmatpush.xpose.msra.mxu0 0.0
  %1471 = vmatpush.xpose.msra.mxu0 0.0
  %1472 = vmatpush.xpose.msra.mxu0 0.0
  %1473 = vmatpush.xpose.msra.mxu0 0.0
  %1474 = vmatpush.xpose.msra.mxu0 0.0
  %1475 = vmatpush.xpose.msra.mxu0 0.0
  %1476 = vmatpush.xpose.msra.mxu0 0.0
  %1477 = vmatpush.xpose.msra.mxu0 0.0
  %1478 = vmatpush.xpose.msra.mxu0 0.0
  %1479 = vmatpush.xpose.msra.mxu0 0.0
  %1480 = vmatpush.xpose.msra.mxu0 0.0
  %1481 = vmatpush.xpose.msra.mxu0 0.0
  %1482 = vmatpush.xpose.msra.mxu0 0.0
  %1483 = vmatpush.xpose.msra.mxu0 0.0
  %1484 = vmatpush.xpose.msra.mxu0 %v1468
  %1485 = vmatpush.xpose.msra.mxu0 %v1465
  %1486 = vmatmul.f32.gmra.mxu0 %v1462
  %v1487 = vpop.f32.mrf.mxu0
  %v1488 = vadd.f32 0.0, %v1487
  %1489 = vdwg.mxu0
  %v1490 = vld [vmem:[%s4 + $0xe0] sm:$0xff]
  %v1491 = vld [vmem:[%s4 + $0xe8] sm:$0xff]
  %v1492 = vld [vmem:[%s4 + $0xf0] sm:$0xff]
  %v1493 = vld [vmem:[%s4 + $0xf8] sm:$0xff]
  %v1494 = vld [vmem:[%s6 + $0x120] sm:$0xff]
  %v1495 = vld [vmem:[%s6 + $0x128] sm:$0xff]
  %v1496 = vld [vmem:[%s6 + $0x130] sm:$0xff]
  %v1497 = vld [vmem:[%s6 + $0x138] sm:$0xff]
  %1499 = vset.pattern.permute.xlu0 0
  %1500 = vperm.xlu0 %1499, %v1494
  %v1501 = vpop.permute.xlu0 %1500
  %1504 = vset.pattern.permute.xlu0 0
  %1505 = vperm.xlu0 %1504, %v1495
  %v1506 = vpop.permute.xlu0 %1505
  %1509 = vset.pattern.permute.xlu0 0
  %1510 = vperm.xlu0 %1509, %v1496
  %v1511 = vpop.permute.xlu0 %1510
  %1514 = vset.pattern.permute.xlu0 0
  %1515 = vperm.xlu0 %1514, %v1497
  %v1516 = vpop.permute.xlu0 %1515
  %v1519 = vsel %vm120, %v1490, 0
  %v1522 = vsel %vm120, %v1491, 0
  %v1525 = vsel %vm120, %v1492, 0
  %v1528 = vsel %vm120, %v1493, 0
  %1530 = vmatpush.msra.mxu0 0.0
  %1531 = vmatpush.msra.mxu0 0.0
  %1532 = vmatpush.msra.mxu0 0.0
  %1533 = vmatpush.msra.mxu0 0.0
  %1534 = vmatpush.msra.mxu0 0.0
  %1535 = vmatpush.msra.mxu0 0.0
  %1536 = vmatpush.msra.mxu0 0.0
  %1537 = vmatpush.msra.mxu0 0.0
  %1538 = vmatpush.msra.mxu0 0.0
  %1539 = vmatpush.msra.mxu0 0.0
  %1540 = vmatpush.msra.mxu0 0.0
  %1541 = vmatpush.msra.mxu0 0.0
  %1542 = vmatpush.msra.mxu0 %v1488
  %1543 = vmatpush.msra.mxu0 %v1459
  %1544 = vmatpush.msra.mxu0 %v1430
  %1545 = vmatpush.msra.mxu0 %v1401
  %1546 = vmatmul.f32.gmra.mxu0 %v1519
  %v1547 = vpop.f32.mrf.mxu0
  %v1548 = vadd.f32 %v1501, %v1547
  %1549 = vmatmul.f32.gmra.mxu0 %v1522
  %v1550 = vpop.f32.mrf.mxu0
  %v1551 = vadd.f32 %v1506, %v1550
  %1552 = vmatmul.f32.gmra.mxu0 %v1525
  %v1553 = vpop.f32.mrf.mxu0
  %v1554 = vadd.f32 %v1511, %v1553
  %1555 = vmatmul.f32.gmra.mxu0 %v1528
  %v1556 = vpop.f32.mrf.mxu0
  %v1557 = vadd.f32 %v1516, %v1556
  %1558 = vdwg.mxu0
  %v1559 = vadd.f32 %v845, %v1548
  %v1560 = vadd.f32 %v846, %v1551
  %v1561 = vadd.f32 %v847, %v1554
  %v1562 = vadd.f32 %v848, %v1557
  %v1563 = vld [vmem:[%s6 + $0x140] sm:$0xff]
  %v1564 = vld [vmem:[%s6 + $0x148] sm:$0xff]
  %v1565 = vld [vmem:[%s6 + $0x150] sm:$0xff]
  %v1566 = vld [vmem:[%s6 + $0x158] sm:$0xff]
  %v1567 = vld [vmem:[%s6 + $0x160] sm:$0xff]
  %v1568 = vld [vmem:[%s6 + $0x168] sm:$0xff]
  %v1569 = vld [vmem:[%s6 + $0x170] sm:$0xff]
  %v1570 = vld [vmem:[%s6 + $0x178] sm:$0xff]
  %v1571 = vsel %vm457, %v1559, 0.0
  %v1572 = vsel %vm457, %v1560, 0.0
  %v1573 = vadd.f32 %v1571, %v1572
  %v1574 = vsel %vm457, %v1561, 0.0
  %v1575 = vadd.f32 %v1573, %v1574
  %v1576 = vsel %vm457, %v1562, 0.0
  %v1577 = vadd.f32 %v1575, %v1576
  %v1578 = vrot.slane %v1577, 4
  %v1579 = vadd.f32 %v1577, %v1578
  %v1580 = vrot.slane %v1579, 2
  %v1581 = vadd.f32 %v1579, %v1580
  %v1582 = vrot.slane %v1581, 1
  %v1583 = vadd.f32 %v1581, %v1582
  %v1584 = vmul.f32 %v1583, %v762
  %v1585 = vsub.f32 %v1559, %v1584
  %v1586 = vsub.f32 %v1560, %v1584
  %v1587 = vsub.f32 %v1561, %v1584
  %v1588 = vsub.f32 %v1562, %v1584
  %v1589 = vmul.f32 %v1585, %v1585
  %v1590 = vmul.f32 %v1586, %v1586
  %v1591 = vmul.f32 %v1587, %v1587
  %v1592 = vmul.f32 %v1588, %v1588
  %v1593 = vsel %vm457, %v1589, 0.0
  %v1594 = vsel %vm457, %v1590, 0.0
  %v1595 = vadd.f32 %v1593, %v1594
  %v1596 = vsel %vm457, %v1591, 0.0
  %v1597 = vadd.f32 %v1595, %v1596
  %v1598 = vsel %vm457, %v1592, 0.0
  %v1599 = vadd.f32 %v1597, %v1598
  %v1600 = vrot.slane %v1599, 4
  %v1601 = vadd.f32 %v1599, %v1600
  %v1602 = vrot.slane %v1601, 2
  %v1603 = vadd.f32 %v1601, %v1602
  %v1604 = vrot.slane %v1603, 1
  %v1605 = vadd.f32 %v1603, %v1604
  %v1606 = vmul.f32 %v1605, %v762
  %v1607 = vadd.f32 %v1606, 1e-05
  %v1608 = vrsqrt.pop %v1607
  %v1609 = vmul.f32 %v1608, %v1607
  %v1610 = vmul.f32 %v1609, %v1608
  %v1611 = vmul.f32 0.5, %v1610
  %v1612 = vsub.f32 1.5, %v1611
  %v1613 = vmul.f32 %v1608, %v1612
  %vm1614 = vweird.f32 %v1607
  %vm1615 = vweird.f32 %v1608
  %vm1616 = vmor %vm1614, %vm1615
  %v1617 = vsel %vm1616, %v1608, %v1613
  %v1618 = vmul.f32 %v1585, %v1617
  %v1619 = vmul.f32 %v1586, %v1617
  %v1620 = vmul.f32 %v1587, %v1617
  %v1621 = vmul.f32 %v1588, %v1617
  %1623 = vset.pattern.permute.xlu0 0
  %1624 = vperm.xlu0 %1623, %v1563
  %v1625 = vpop.permute.xlu0 %1624
  %1628 = vset.pattern.permute.xlu0 0
  %1629 = vperm.xlu0 %1628, %v1564
  %v1630 = vpop.permute.xlu0 %1629
  %1633 = vset.pattern.permute.xlu0 0
  %1634 = vperm.xlu0 %1633, %v1565
  %v1635 = vpop.permute.xlu0 %1634
  %1638 = vset.pattern.permute.xlu0 0
  %1639 = vperm.xlu0 %1638, %v1566
  %v1640 = vpop.permute.xlu0 %1639
  %v1642 = vmul.f32 %v1618, %v1625
  %v1643 = vmul.f32 %v1619, %v1630
  %v1644 = vmul.f32 %v1620, %v1635
  %v1645 = vmul.f32 %v1621, %v1640
  %1647 = vset.pattern.permute.xlu0 0
  %1648 = vperm.xlu0 %1647, %v1567
  %v1649 = vpop.permute.xlu0 %1648
  %1652 = vset.pattern.permute.xlu0 0
  %1653 = vperm.xlu0 %1652, %v1568
  %v1654 = vpop.permute.xlu0 %1653
  %1657 = vset.pattern.permute.xlu0 0
  %1658 = vperm.xlu0 %1657, %v1569
  %v1659 = vpop.permute.xlu0 %1658
  %1662 = vset.pattern.permute.xlu0 0
  %1663 = vperm.xlu0 %1662, %v1570
  %v1664 = vpop.permute.xlu0 %1663
  %v1666 = vadd.f32 %v1642, %v1649
  %v1667 = vadd.f32 %v1643, %v1654
  %v1668 = vadd.f32 %v1644, %v1659
  %v1669 = vadd.f32 %v1645, %v1664
  %v1670 = vld [vmem:[%s4 + $0x100] sm:$0xff]
  %v1671 = vld [vmem:[%s4 + $0x108] sm:$0xff]
  %v1672 = vld [vmem:[%s4 + $0x110] sm:$0xff]
  %v1673 = vld [vmem:[%s4 + $0x118] sm:$0xff]
  %v1674 = vld [vmem:[%s4 + $0x120] sm:$0xff]
  %v1675 = vld [vmem:[%s4 + $0x128] sm:$0xff]
  %v1676 = vld [vmem:[%s4 + $0x130] sm:$0xff]
  %v1677 = vld [vmem:[%s4 + $0x138] sm:$0xff]
  %v1678 = vld [vmem:[%s6 + $0x180] sm:$0xff]
  %v1679 = vld [vmem:[%s6 + $0x188] sm:$0xff]
  %v1680 = vld [vmem:[%s6 + $0x190] sm:$0xff]
  %v1681 = vld [vmem:[%s6 + $0x198] sm:$0xff]
  %v1682 = vld [vmem:[%s6 + $0x1a0] sm:$0xff]
  %v1683 = vld [vmem:[%s6 + $0x1a8] sm:$0xff]
  %v1684 = vld [vmem:[%s6 + $0x1b0] sm:$0xff]
  %v1685 = vld [vmem:[%s6 + $0x1b8] sm:$0xff]
  %1687 = vset.pattern.permute.xlu0 0
  %1688 = vperm.xlu0 %1687, %v1678
  %v1689 = vpop.permute.xlu0 %1688
  %1692 = vset.pattern.permute.xlu0 0
  %1693 = vperm.xlu0 %1692, %v1679
  %v1694 = vpop.permute.xlu0 %1693
  %1697 = vset.pattern.permute.xlu0 0
  %1698 = vperm.xlu0 %1697, %v1680
  %v1699 = vpop.permute.xlu0 %1698
  %1702 = vset.pattern.permute.xlu0 0
  %1703 = vperm.xlu0 %1702, %v1681
  %v1704 = vpop.permute.xlu0 %1703
  %1707 = vset.pattern.permute.xlu0 0
  %1708 = vperm.xlu0 %1707, %v1682
  %v1709 = vpop.permute.xlu0 %1708
  %1712 = vset.pattern.permute.xlu0 0
  %1713 = vperm.xlu0 %1712, %v1683
  %v1714 = vpop.permute.xlu0 %1713
  %1717 = vset.pattern.permute.xlu0 0
  %1718 = vperm.xlu0 %1717, %v1684
  %v1719 = vpop.permute.xlu0 %1718
  %1722 = vset.pattern.permute.xlu0 0
  %1723 = vperm.xlu0 %1722, %v1685
  %v1724 = vpop.permute.xlu0 %1723
  %v1727 = vsel %vm120, %v1670, 0
  %v1730 = vsel %vm120, %v1671, 0
  %v1733 = vsel %vm120, %v1672, 0
  %v1736 = vsel %vm120, %v1673, 0
  %v1739 = vsel %vm120, %v1674, 0
  %v1742 = vsel %vm120, %v1675, 0
  %v1745 = vsel %vm120, %v1676, 0
  %v1748 = vsel %vm120, %v1677, 0
  %1750 = vmatpush.msra.mxu0 0.0
  %1751 = vmatpush.msra.mxu0 0.0
  %1752 = vmatpush.msra.mxu0 0.0
  %1753 = vmatpush.msra.mxu0 0.0
  %1754 = vmatpush.msra.mxu0 0.0
  %1755 = vmatpush.msra.mxu0 0.0
  %1756 = vmatpush.msra.mxu0 0.0
  %1757 = vmatpush.msra.mxu0 0.0
  %1758 = vmatpush.msra.mxu0 0.0
  %1759 = vmatpush.msra.mxu0 0.0
  %1760 = vmatpush.msra.mxu0 0.0
  %1761 = vmatpush.msra.mxu0 0.0
  %1762 = vmatpush.msra.mxu0 %v1669
  %1763 = vmatpush.msra.mxu0 %v1668
  %1764 = vmatpush.msra.mxu0 %v1667
  %1765 = vmatpush.msra.mxu0 %v1666
  %1766 = vmatmul.f32.gmra.mxu0 %v1727
  %v1767 = vpop.f32.mrf.mxu0
  %v1768 = vadd.f32 %v1689, %v1767
  %1769 = vmatmul.f32.gmra.mxu0 %v1730
  %v1770 = vpop.f32.mrf.mxu0
  %v1771 = vadd.f32 %v1694, %v1770
  %1772 = vmatmul.f32.gmra.mxu0 %v1733
  %v1773 = vpop.f32.mrf.mxu0
  %v1774 = vadd.f32 %v1699, %v1773
  %1775 = vmatmul.f32.gmra.mxu0 %v1736
  %v1776 = vpop.f32.mrf.mxu0
  %v1777 = vadd.f32 %v1704, %v1776
  %1778 = vmatmul.f32.gmra.mxu0 %v1739
  %v1779 = vpop.f32.mrf.mxu0
  %v1780 = vadd.f32 %v1709, %v1779
  %1781 = vmatmul.f32.gmra.mxu0 %v1742
  %v1782 = vpop.f32.mrf.mxu0
  %v1783 = vadd.f32 %v1714, %v1782
  %1784 = vmatmul.f32.gmra.mxu0 %v1745
  %v1785 = vpop.f32.mrf.mxu0
  %v1786 = vadd.f32 %v1719, %v1785
  %1787 = vmatmul.f32.gmra.mxu0 %v1748
  %v1788 = vpop.f32.mrf.mxu0
  %v1789 = vadd.f32 %v1724, %v1788
  %1790 = vdwg.mxu0
  %v1791 = vmax.f32 %v1768, 0.0
  %v1792 = vmax.f32 %v1771, 0.0
  %v1793 = vmax.f32 %v1774, 0.0
  %v1794 = vmax.f32 %v1777, 0.0
  %v1795 = vmax.f32 %v1780, 0.0
  %v1796 = vmax.f32 %v1783, 0.0
  %v1797 = vmax.f32 %v1786, 0.0
  %v1798 = vmax.f32 %v1789, 0.0
  %v1799 = vld [vmem:[%s5] sm:$0xff]
  %v1800 = vld [vmem:[%s5 + $0x8] sm:$0xff]
  %v1801 = vld [vmem:[%s5 + $0x10] sm:$0xff]
  %v1802 = vld [vmem:[%s5 + $0x18] sm:$0xff]
  %v1803 = vld [vmem:[%s6 + $0x1c0] sm:$0xff]
  %v1804 = vld [vmem:[%s6 + $0x1c8] sm:$0xff]
  %v1805 = vld [vmem:[%s6 + $0x1d0] sm:$0xff]
  %v1806 = vld [vmem:[%s6 + $0x1d8] sm:$0xff]
  %1808 = vset.pattern.permute.xlu0 0
  %1809 = vperm.xlu0 %1808, %v1803
  %v1810 = vpop.permute.xlu0 %1809
  %1813 = vset.pattern.permute.xlu0 0
  %1814 = vperm.xlu0 %1813, %v1804
  %v1815 = vpop.permute.xlu0 %1814
  %1818 = vset.pattern.permute.xlu0 0
  %1819 = vperm.xlu0 %1818, %v1805
  %v1820 = vpop.permute.xlu0 %1819
  %1823 = vset.pattern.permute.xlu0 0
  %1824 = vperm.xlu0 %1823, %v1806
  %v1825 = vpop.permute.xlu0 %1824
  %vm1827 = vcmask 523264
  %v1829 = vsel %vm1827, %v1799, 0
  %v1832 = vsel %vm1827, %v1800, 0
  %v1835 = vsel %vm1827, %v1801, 0
  %v1838 = vsel %vm1827, %v1802, 0
  %1840 = vmatpush.msra.mxu0 0.0
  %1841 = vmatpush.msra.mxu0 0.0
  %1842 = vmatpush.msra.mxu0 0.0
  %1843 = vmatpush.msra.mxu0 0.0
  %1844 = vmatpush.msra.mxu0 0.0
  %1845 = vmatpush.msra.mxu0 0.0
  %1846 = vmatpush.msra.mxu0 0.0
  %1847 = vmatpush.msra.mxu0 0.0
  %1848 = vmatpush.msra.mxu0 %v1798
  %1849 = vmatpush.msra.mxu0 %v1797
  %1850 = vmatpush.msra.mxu0 %v1796
  %1851 = vmatpush.msra.mxu0 %v1795
  %1852 = vmatpush.msra.mxu0 %v1794
  %1853 = vmatpush.msra.mxu0 %v1793
  %1854 = vmatpush.msra.mxu0 %v1792
  %1855 = vmatpush.msra.mxu0 %v1791
  %1856 = vmatmul.f32.gmra.mxu0 %v1829
  %v1857 = vpop.f32.mrf.mxu0
  %v1858 = vadd.f32 %v1810, %v1857
  %1859 = vmatmul.f32.gmra.mxu0 %v1832
  %v1860 = vpop.f32.mrf.mxu0
  %v1861 = vadd.f32 %v1815, %v1860
  %1862 = vmatmul.f32.gmra.mxu0 %v1835
  %v1863 = vpop.f32.mrf.mxu0
  %v1864 = vadd.f32 %v1820, %v1863
  %1865 = vmatmul.f32.gmra.mxu0 %v1838
  %v1866 = vpop.f32.mrf.mxu0
  %v1867 = vadd.f32 %v1825, %v1866
  %1868 = vdwg.mxu0
  %v1869 = vadd.f32 %v1666, %v1858
  %v1870 = vadd.f32 %v1667, %v1861
  %v1871 = vadd.f32 %v1668, %v1864
  %v1872 = vadd.f32 %v1669, %v1867
  %v1873 = vld [vmem:[%s6 + $0x1e0] sm:$0xff]
  %v1874 = vld [vmem:[%s6 + $0x1e8] sm:$0xff]
  %v1875 = vld [vmem:[%s6 + $0x1f0] sm:$0xff]
  %v1876 = vld [vmem:[%s6 + $0x1f8] sm:$0xff]
  %v1877 = vld [vmem:[%s6 + $0x200] sm:$0xff]
  %v1878 = vld [vmem:[%s6 + $0x208] sm:$0xff]
  %v1879 = vld [vmem:[%s6 + $0x210] sm:$0xff]
  %v1880 = vld [vmem:[%s6 + $0x218] sm:$0xff]
  %v1881 = vsel %vm457, %v1869, 0.0
  %v1882 = vsel %vm457, %v1870, 0.0
  %v1883 = vadd.f32 %v1881, %v1882
  %v1884 = vsel %vm457, %v1871, 0.0
  %v1885 = vadd.f32 %v1883, %v1884
  %v1886 = vsel %vm457, %v1872, 0.0
  %v1887 = vadd.f32 %v1885, %v1886
  %v1888 = vrot.slane %v1887, 4
  %v1889 = vadd.f32 %v1887, %v1888
  %v1890 = vrot.slane %v1889, 2
  %v1891 = vadd.f32 %v1889, %v1890
  %v1892 = vrot.slane %v1891, 1
  %v1893 = vadd.f32 %v1891, %v1892
  %v1894 = vmul.f32 %v1893, %v762
  %v1895 = vsub.f32 %v1869, %v1894
  %v1896 = vsub.f32 %v1870, %v1894
  %v1897 = vsub.f32 %v1871, %v1894
  %v1898 = vsub.f32 %v1872, %v1894
  %v1899 = vmul.f32 %v1895, %v1895
  %v1900 = vmul.f32 %v1896, %v1896
  %v1901 = vmul.f32 %v1897, %v1897
  %v1902 = vmul.f32 %v1898, %v1898
  %v1903 = vsel %vm457, %v1899, 0.0
  %v1904 = vsel %vm457, %v1900, 0.0
  %v1905 = vadd.f32 %v1903, %v1904
  %v1906 = vsel %vm457, %v1901, 0.0
  %v1907 = vadd.f32 %v1905, %v1906
  %v1908 = vsel %vm457, %v1902, 0.0
  %v1909 = vadd.f32 %v1907, %v1908
  %v1910 = vrot.slane %v1909, 4
  %v1911 = vadd.f32 %v1909, %v1910
  %v1912 = vrot.slane %v1911, 2
  %v1913 = vadd.f32 %v1911, %v1912
  %v1914 = vrot.slane %v1913, 1
  %v1915 = vadd.f32 %v1913, %v1914
  %v1916 = vmul.f32 %v1915, %v762
  %v1917 = vadd.f32 %v1916, 1e-05
  %v1918 = vrsqrt.pop %v1917
  %v1919 = vmul.f32 %v1918, %v1917
  %v1920 = vmul.f32 %v1919, %v1918
  %v1921 = vmul.f32 0.5, %v1920
  %v1922 = vsub.f32 1.5, %v1921
  %v1923 = vmul.f32 %v1918, %v1922
  %vm1924 = vweird.f32 %v1917
  %vm1925 = vweird.f32 %v1918
  %vm1926 = vmor %vm1924, %vm1925
  %v1927 = vsel %vm1926, %v1918, %v1923
  %v1928 = vmul.f32 %v1895, %v1927
  %v1929 = vmul.f32 %v1896, %v1927
  %v1930 = vmul.f32 %v1897, %v1927
  %v1931 = vmul.f32 %v1898, %v1927
  %1933 = vset.pattern.permute.xlu0 0
  %1934 = vperm.xlu0 %1933, %v1873
  %v1935 = vpop.permute.xlu0 %1934
  %1938 = vset.pattern.permute.xlu0 0
  %1939 = vperm.xlu0 %1938, %v1874
  %v1940 = vpop.permute.xlu0 %1939
  %1943 = vset.pattern.permute.xlu0 0
  %1944 = vperm.xlu0 %1943, %v1875
  %v1945 = vpop.permute.xlu0 %1944
  %1948 = vset.pattern.permute.xlu0 0
  %1949 = vperm.xlu0 %1948, %v1876
  %v1950 = vpop.permute.xlu0 %1949
  %v1952 = vmul.f32 %v1928, %v1935
  %v1953 = vmul.f32 %v1929, %v1940
  %v1954 = vmul.f32 %v1930, %v1945
  %v1955 = vmul.f32 %v1931, %v1950
  %1957 = vset.pattern.permute.xlu0 0
  %1958 = vperm.xlu0 %1957, %v1877
  %v1959 = vpop.permute.xlu0 %1958
  %1962 = vset.pattern.permute.xlu0 0
  %1963 = vperm.xlu0 %1962, %v1878
  %v1964 = vpop.permute.xlu0 %1963
  %1967 = vset.pattern.permute.xlu0 0
  %1968 = vperm.xlu0 %1967, %v1879
  %v1969 = vpop.permute.xlu0 %1968
  %1972 = vset.pattern.permute.xlu0 0
  %1973 = vperm.xlu0 %1972, %v1880
  %v1974 = vpop.permute.xlu0 %1973
  %v1976 = vadd.f32 %v1952, %v1959
  %v1977 = vadd.f32 %v1953, %v1964
  %v1978 = vadd.f32 %v1954, %v1969
  %v1979 = vadd.f32 %v1955, %v1974
  %1980 = vst.msk [vmem:[%s7] sm:$0xff] %vm457, %v1976
  %1981 = vst.msk [vmem:[%s7 + $0x8] sm:$0xff] %vm457, %v1977
  %1982 = vst.msk [vmem:[%s7 + $0x10] sm:$0xff] %vm457, %v1978
  %1983 = vst.msk [vmem:[%s7 + $0x18] sm:$0xff] %vm457, %v1979
  %v1984 = vsel %vm1285, %v1366, 0.0
  %v1985 = vsel %vm1285, %v1368, 0.0
  %v1986 = vadd.f32 %v1984, %v1985
  %v1987 = vsel %vm1285, %v1370, 0.0
  %v1988 = vadd.f32 %v1986, %v1987
  %v1989 = vsel %vm1285, %v1372, 0.0
  %v1990 = vadd.f32 %v1988, %v1989
  %v1991 = vsel %vm1285, %v1367, 0.0
  %v1992 = vsel %vm1285, %v1369, 0.0
  %v1993 = vadd.f32 %v1991, %v1992
  %v1994 = vsel %vm1285, %v1371, 0.0
  %v1995 = vadd.f32 %v1993, %v1994
  %v1996 = vsel %vm1285, %v1373, 0.0
  %v1997 = vadd.f32 %v1995, %v1996
  %v1998 = vrcp.pop 4.0
  %v1999 = vmul.f32 4.0, %v1998
  %v2000 = vsub.f32 1.0, %v1999
  %v2001 = vmul.f32 %v1998, %v2000
  %v2002 = vadd.f32 %v1998, %v2001
  %vm2003 = vweird.f32 %v1998
  %v2004 = vsel %vm2003, %v1998, %v2002
  %v2005 = vmul.f32 %v1990, %v2004
  %v2006 = vmul.f32 %v1997, %v2004
  %2007 = vst.msk [vmem:[%s8] sm:$0xff] %vm1285, %v2005
  %2008 = vst.msk [vmem:[%s8 + $0x8] sm:$0xff] %vm1285, %v2006
  // Predicated region
  $region30: #{transformer_decoder_layer.1} parent=0 // pred_check
    _
  $region31: #{transformer_decoder_layer.1} parent=0 // pred_check_branch
    %2010 = sbr.rel (0) target = $region33
  $region32: #{transformer_decoder_layer.1} parent=0 // pred_region
    _
  $region33: #{transformer_decoder_layer.1} parent=0 // pred_fallthru
    _
  // Predicated region
  $region34: #{transformer_decoder_layer.1} parent=0 // pred_check
    _
  $region35: #{transformer_decoder_layer.1} parent=0 // pred_check_branch
    %2012 = sbr.rel (0) target = $region37
  $region36: #{transformer_decoder_layer.1} parent=0 // pred_region
    _
  $region37: #{transformer_decoder_layer.1} parent=0 // pred_fallthru
    _
  // Predicated region
  $region38: #{transformer_decoder_layer.1} parent=0 // pred_check
    _
  $region39: #{transformer_decoder_layer.1} parent=0 // pred_check_branch
    %2014 = sbr.rel (0) target = $region41
  $region40: #{transformer_decoder_layer.1} parent=0 // pred_region
    _
  $region41: #{transformer_decoder_layer.1} parent=0 // pred_fallthru
    _
  // Predicated region
  $region42: #{transformer_decoder_layer.1} parent=0 // pred_check
    _
  $region43: #{transformer_decoder_layer.1} parent=0 // pred_check_branch
    %2016 = sbr.rel (0) target = $region45
  $region44: #{transformer_decoder_layer.1} parent=0 // pred_region
    _
  $region45: #{transformer_decoder_layer.1} parent=0 // pred_fallthru
    _

</llo_original>
